<compile_context>
chip_gen: v7x
topology: tpu7x:2x2x1
jax: 0.10.0
libtpu: 0.0.40
codegen_flags: <defaults>
</compile_context>

<pallas_src>
import jax
import jax.numpy as jnp
from jax import lax
from jax.experimental import pallas as pl
from jax.experimental.pallas import tpu as pltpu


# ------------------------------- Fused kernel ------------------------------- #

def _make_fused_kernel(num_layers, T, Bp, H):
    """Builds the fused LSTM-stack + FC kernel for static (num_layers, T, Bp, H)."""

    def kernel(*refs):
        # refs layout: x2d, (wih_t, whh_t, bias) * num_layers, fc_w_t, fc_b,
        #              out_ref, gx_scr, seq_scr
        x_ref = refs[0]
        layer_refs = [(refs[1 + 3 * l], refs[2 + 3 * l], refs[3 + 3 * l])
                      for l in range(num_layers)]
        fcw_ref = refs[1 + 3 * num_layers]
        fcb_ref = refs[2 + 3 * num_layers]
        out_ref = refs[3 + 3 * num_layers]
        gx_scr = refs[4 + 3 * num_layers]    # (T*Bp, 4H) hoisted input gates
        seq_scr = refs[5 + 3 * num_layers]   # (T*Bp, H)  inter-layer hidden seq

        h_last = jnp.zeros((Bp, H), jnp.float32)

        for layer, (wih_ref, whh_ref, b_ref) in enumerate(layer_refs):
            # ---- hoisted input projection for ALL timesteps: one MXU matmul ----
            inp = x_ref[...] if layer == 0 else seq_scr[...]      # (T*Bp, Din)
            gx_scr[...] = (
                jnp.dot(inp, wih_ref[...], preferred_element_type=jnp.float32)
                + b_ref[...])                                     # (T*Bp, 4H)

            whh = whh_ref[...]                                    # (H, 4H)

            # ---- recurrence: only h @ W_hh^T remains inside the time loop ----
            def step(t, carry, _whh=whh):
                h, c = carry
                r0 = pl.multiple_of(t * Bp, Bp)                   # sublane-aligned
                gates = gx_scr[pl.ds(r0, Bp), :] + jnp.dot(
                    h, _whh, preferred_element_type=jnp.float32)  # (Bp, 4H)

                # activations over the full 128-lane tile (EUP), then slice
                sg = jax.nn.sigmoid(gates)
                th = jnp.tanh(gates)
                i_g = sg[:, 0 * H:1 * H]
                f_g = sg[:, 1 * H:2 * H]
                g_g = th[:, 2 * H:3 * H]
                o_g = sg[:, 3 * H:4 * H]

                c_new = f_g * c + i_g * g_g
                h_new = o_g * jnp.tanh(c_new)
                seq_scr[pl.ds(r0, Bp), :] = h_new                 # feed next layer
                return (h_new, c_new)

            init = (jnp.zeros((Bp, H), jnp.float32),
                    jnp.zeros((Bp, H), jnp.float32))
            h_last, _ = lax.fori_loop(0, T, step, init, unroll=True)

        # ---- final Linear on the last timestep's hidden state ----
        out_ref[...] = (
            jnp.dot(h_last, fcw_ref[...], preferred_element_type=jnp.float32)
            + fcb_ref[...])

    return kernel


# ------------------------------- Host wrapper ------------------------------- #

@jax.jit
def task_config_network_forward(x, params):
    """Forward pass of TaskConfigNetwork.

    x: (B, T, input_size) float32 (batch_first, like the PyTorch module)
    returns: (B, output_size) float32
    """
    x = x.astype(jnp.float32)
    B, T, D = x.shape
    lstm = params["lstm"]
    num_layers = len(lstm)
    H = lstm[0][1].shape[1]            # w_hh: (4H, H)
    O = params["fc_w"].shape[0]
    Bp = ((B + 7) // 8) * 8            # pad batch to sublane multiple

    # Single fused XLA prep: time-major, pad batch, flatten so each timestep
    # is a contiguous, aligned (Bp, D) sublane block.
    xt = jnp.transpose(x, (1, 0, 2))                     # (T, B, D)
    xt = jnp.pad(xt, ((0, 0), (0, Bp - B), (0, 0)))      # (T, Bp, D)
    x2 = xt.reshape(T * Bp, D)

    inputs = [x2]
    for (w_ih, w_hh, b_ih, b_hh) in lstm:
        inputs.append(jnp.transpose(w_ih).astype(jnp.float32))      # (Din, 4H)
        inputs.append(jnp.transpose(w_hh).astype(jnp.float32))      # (H, 4H)
        inputs.append((b_ih + b_hh).astype(jnp.float32)[None, :])   # (1, 4H)
    inputs.append(jnp.transpose(params["fc_w"]).astype(jnp.float32))  # (H, O)
    inputs.append(params["fc_b"].astype(jnp.float32)[None, :])        # (1, O)

    kernel = _make_fused_kernel(num_layers, T, Bp, H)
    vmem = pl.BlockSpec(memory_space=pltpu.MemorySpace.VMEM)

    out_padded = pl.pallas_call(
        kernel,
        out_shape=jax.ShapeDtypeStruct((Bp, O), jnp.float32),
        in_specs=[vmem] * len(inputs),
        out_specs=vmem,
        scratch_shapes=[
            pltpu.VMEM((T * Bp, 4 * H), jnp.float32),   # hoisted gates
            pltpu.VMEM((T * Bp, H), jnp.float32),       # inter-layer hidden seq
        ],
    )(*inputs)

    return out_padded[:B]                                # drop padded batch rows


# --------------------------- Parameter construction ------------------------- #

def init_params(key, input_size, hidden_size, num_layers, output_size):
    """Deterministic init mimicking PyTorch's uniform(-1/sqrt(H), 1/sqrt(H))."""
    k = 1.0 / jnp.sqrt(jnp.float32(hidden_size))
    lstm_params = []
    for layer in range(num_layers):
        d_in = input_size if layer == 0 else hidden_size
        key, k1, k2, k3, k4 = jax.random.split(key, 5)
        w_ih = jax.random.uniform(k1, (4 * hidden_size, d_in), jnp.float32, -k, k)
        w_hh = jax.random.uniform(k2, (4 * hidden_size, hidden_size), jnp.float32, -k, k)
        b_ih = jax.random.uniform(k3, (4 * hidden_size,), jnp.float32, -k, k)
        b_hh = jax.random.uniform(k4, (4 * hidden_size,), jnp.float32, -k, k)
        lstm_params.append((w_ih, w_hh, b_ih, b_hh))
    key, k5, k6 = jax.random.split(key, 3)
    kf = 1.0 / jnp.sqrt(jnp.float32(hidden_size))
    fc_w = jax.random.uniform(k5, (output_size, hidden_size), jnp.float32, -kf, kf)
    fc_b = jax.random.uniform(k6, (output_size,), jnp.float32, -kf, kf)
    return {"lstm": lstm_params, "fc_w": fc_w, "fc_b": fc_b}


# ------------------------------ Pure-JAX reference --------------------------- #

def reference_forward(x, params):
    B = x.shape[0]
    H = params["lstm"][0][1].shape[1]
    seq = x.astype(jnp.float32)
    for (w_ih, w_hh, b_ih, b_hh) in params["lstm"]:
        def step(carry, x_t):
            h, c = carry
            g = x_t @ w_ih.T + h @ w_hh.T + b_ih + b_hh
            i = jax.nn.sigmoid(g[:, 0 * H:1 * H])
            f = jax.nn.sigmoid(g[:, 1 * H:2 * H])
            gg = jnp.tanh(g[:, 2 * H:3 * H])
            o = jax.nn.sigmoid(g[:, 3 * H:4 * H])
            c = f * c + i * gg
            h = o * jnp.tanh(c)
            return (h, c), h
        h0 = jnp.zeros((B, H), jnp.float32)
        c0 = jnp.zeros((B, H), jnp.float32)
        (_, _), hs = lax.scan(step, (h0, c0), jnp.transpose(seq, (1, 0, 2)))
        seq = jnp.transpose(hs, (1, 0, 2))
    return seq[:, -1, :] @ params["fc_w"].T + params["fc_b"]


# ------------------------------------ Main ----------------------------------- #

if __name__ == "__main__":
    INPUT_SIZE, HIDDEN_SIZE, NUM_LAYERS, OUTPUT_SIZE = 16, 32, 2, 8
    B, T = 2, 8

    key = jax.random.PRNGKey(0)
    key, pkey, xkey = jax.random.split(key, 3)
    params = init_params(pkey, INPUT_SIZE, HIDDEN_SIZE, NUM_LAYERS, OUTPUT_SIZE)
    x = jax.random.normal(xkey, (B, T, INPUT_SIZE), jnp.float32)

    out = jax.block_until_ready(task_config_network_forward(x, params))

    ref = reference_forward(x, params)
    assert out.shape == (B, OUTPUT_SIZE), out.shape
    assert jnp.allclose(out, ref, atol=1e-5, rtol=1e-5), (
        f"max err {jnp.max(jnp.abs(out - ref))}")

    print("KERNEL_OK")
</pallas_src>

<mosaic_0001>
module attributes {stable_mosaic.version = 11 : i64} {
  func.func @kernel(%arg0: memref<64x16xf32, #tpu.memory_space<vmem>>, %arg1: memref<16x128xf32, #tpu.memory_space<vmem>>, %arg2: memref<32x128xf32, #tpu.memory_space<vmem>>, %arg3: memref<1x128xf32, #tpu.memory_space<vmem>>, %arg4: memref<32x128xf32, #tpu.memory_space<vmem>>, %arg5: memref<32x128xf32, #tpu.memory_space<vmem>>, %arg6: memref<1x128xf32, #tpu.memory_space<vmem>>, %arg7: memref<32x8xf32, #tpu.memory_space<vmem>>, %arg8: memref<1x8xf32, #tpu.memory_space<vmem>>, %arg9: memref<8x8xf32, #tpu.memory_space<vmem>>, %arg10: memref<64x128xf32, #tpu.memory_space<vmem>>, %arg11: memref<64x32xf32, #tpu.memory_space<vmem>>) attributes {dimension_semantics = [], scalar_prefetch = 0 : i64, scratch_operands = 2 : i64, tpu.core_type = #tpu.core_type<tc>} {
    %c0 = arith.constant 0 : index
    %c0_0 = arith.constant 0 : index
    %0 = vector.load %arg0[%c0, %c0_0] : memref<64x16xf32, #tpu.memory_space<vmem>>, vector<64x16xf32>
    %c0_1 = arith.constant 0 : index
    %c0_2 = arith.constant 0 : index
    %1 = vector.load %arg1[%c0_1, %c0_2] : memref<16x128xf32, #tpu.memory_space<vmem>>, vector<16x128xf32>
    %cst = arith.constant dense<0.000000e+00> : vector<64x128xf32>
    %2 = tpu.matmul %0, %1, %cst {dimension_numbers = #tpu.dot_dimension_numbers<[1], [0], [0], [1], [0, 0, 1, 1], [], []>} : vector<64x16xf32>, vector<16x128xf32>, vector<64x128xf32> -> vector<64x128xf32>
    %c0_3 = arith.constant 0 : index
    %c0_4 = arith.constant 0 : index
    %3 = vector.load %arg3[%c0_3, %c0_4] : memref<1x128xf32, #tpu.memory_space<vmem>>, vector<1x128xf32>
    %4 = vector.broadcast %3 : vector<1x128xf32> to vector<64x128xf32>
    %5 = arith.addf %2, %4 : vector<64x128xf32>
    %c0_5 = arith.constant 0 : index
    %c0_6 = arith.constant 0 : index
    %6 = vector.load %arg10[%c0_5, %c0_6] : memref<64x128xf32, #tpu.memory_space<vmem>>, vector<64x128xf32>
    tpu.vector_store %arg10[%c0_5, %c0_6], %5 {strides = array<i32>} : memref<64x128xf32, #tpu.memory_space<vmem>>, vector<64x128xf32>,
    %c0_7 = arith.constant 0 : index
    %c0_8 = arith.constant 0 : index
    %7 = vector.load %arg2[%c0_7, %c0_8] : memref<32x128xf32, #tpu.memory_space<vmem>>, vector<32x128xf32>
    %cst_9 = arith.constant 0.000000e+00 : f32
    %8 = vector.broadcast %cst_9 : f32 to vector<8x32xf32>
    %cst_10 = arith.constant 0.000000e+00 : f32
    %9 = vector.broadcast %cst_10 : f32 to vector<8x32xf32>
    %c0_i32 = arith.constant 0 : i32
    %c8_i32 = arith.constant 8 : i32
    %10 = arith.muli %c0_i32, %c8_i32 : i32
    %11 = tpu.assume_multiple %10, 8 : i32
    %12 = arith.index_cast %11 : i32 to index
    %c0_11 = arith.constant 0 : index
    %13 = vector.load %arg10[%12, %c0_11] : memref<64x128xf32, #tpu.memory_space<vmem>>, vector<8x128xf32>
    %cst_12 = arith.constant dense<0.000000e+00> : vector<8x128xf32>
    %14 = tpu.matmul %8, %7, %cst_12 {dimension_numbers = #tpu.dot_dimension_numbers<[1], [0], [0], [1], [0, 0, 1, 1], [], []>} : vector<8x32xf32>, vector<32x128xf32>, vector<8x128xf32> -> vector<8x128xf32>
    %15 = arith.addf %13, %14 : vector<8x128xf32>
    %16 = arith.negf %15 : vector<8x128xf32>
    %17 = math.exp %16 : vector<8x128xf32>
    %cst_13 = arith.constant 1.000000e+00 : f32
    %18 = vector.broadcast %cst_13 : f32 to vector<8x128xf32>
    %19 = arith.addf %18, %17 : vector<8x128xf32>
    %20 = arith.divf %18, %19 : vector<8x128xf32>
    %21 = math.tanh %15 : vector<8x128xf32>
    %22 = vector.extract_strided_slice %20 {offsets = [0, 0], sizes = [8, 32], strides = [1, 1]} : vector<8x128xf32> to vector<8x32xf32>
    %23 = vector.extract_strided_slice %20 {offsets = [0, 32], sizes = [8, 32], strides = [1, 1]} : vector<8x128xf32> to vector<8x32xf32>
    %24 = vector.extract_strided_slice %21 {offsets = [0, 64], sizes = [8, 32], strides = [1, 1]} : vector<8x128xf32> to vector<8x32xf32>
    %25 = vector.extract_strided_slice %20 {offsets = [0, 96], sizes = [8, 32], strides = [1, 1]} : vector<8x128xf32> to vector<8x32xf32>
    %26 = arith.mulf %23, %9 : vector<8x32xf32>
    %27 = arith.mulf %22, %24 : vector<8x32xf32>
    %28 = arith.addf %26, %27 : vector<8x32xf32>
    %29 = math.tanh %28 : vector<8x32xf32>
    %30 = arith.mulf %25, %29 : vector<8x32xf32>
    %31 = arith.index_cast %11 : i32 to index
    %c0_14 = arith.constant 0 : index
    %32 = vector.load %arg11[%31, %c0_14] : memref<64x32xf32, #tpu.memory_space<vmem>>, vector<8x32xf32>
    tpu.vector_store %arg11[%31, %c0_14], %30 {strides = array<i32>} : memref<64x32xf32, #tpu.memory_space<vmem>>, vector<8x32xf32>,
    %c1_i32 = arith.constant 1 : i32
    %c8_i32_15 = arith.constant 8 : i32
    %33 = arith.muli %c1_i32, %c8_i32_15 : i32
    %34 = tpu.assume_multiple %33, 8 : i32
    %35 = arith.index_cast %34 : i32 to index
    %c0_16 = arith.constant 0 : index
    %36 = vector.load %arg10[%35, %c0_16] : memref<64x128xf32, #tpu.memory_space<vmem>>, vector<8x128xf32>
    %cst_17 = arith.constant dense<0.000000e+00> : vector<8x128xf32>
    %37 = tpu.matmul %30, %7, %cst_17 {dimension_numbers = #tpu.dot_dimension_numbers<[1], [0], [0], [1], [0, 0, 1, 1], [], []>} : vector<8x32xf32>, vector<32x128xf32>, vector<8x128xf32> -> vector<8x128xf32>
    %38 = arith.addf %36, %37 : vector<8x128xf32>
    %39 = arith.negf %38 : vector<8x128xf32>
    %40 = math.exp %39 : vector<8x128xf32>
    %cst_18 = arith.constant 1.000000e+00 : f32
    %41 = vector.broadcast %cst_18 : f32 to vector<8x128xf32>
    %42 = arith.addf %41, %40 : vector<8x128xf32>
    %43 = arith.divf %41, %42 : vector<8x128xf32>
    %44 = math.tanh %38 : vector<8x128xf32>
    %45 = vector.extract_strided_slice %43 {offsets = [0, 0], sizes = [8, 32], strides = [1, 1]} : vector<8x128xf32> to vector<8x32xf32>
    %46 = vector.extract_strided_slice %43 {offsets = [0, 32], sizes = [8, 32], strides = [1, 1]} : vector<8x128xf32> to vector<8x32xf32>
    %47 = vector.extract_strided_slice %44 {offsets = [0, 64], sizes = [8, 32], strides = [1, 1]} : vector<8x128xf32> to vector<8x32xf32>
    %48 = vector.extract_strided_slice %43 {offsets = [0, 96], sizes = [8, 32], strides = [1, 1]} : vector<8x128xf32> to vector<8x32xf32>
    %49 = arith.mulf %46, %28 : vector<8x32xf32>
    %50 = arith.mulf %45, %47 : vector<8x32xf32>
    %51 = arith.addf %49, %50 : vector<8x32xf32>
    %52 = math.tanh %51 : vector<8x32xf32>
    %53 = arith.mulf %48, %52 : vector<8x32xf32>
    %54 = arith.index_cast %34 : i32 to index
    %c0_19 = arith.constant 0 : index
    %55 = vector.load %arg11[%54, %c0_19] : memref<64x32xf32, #tpu.memory_space<vmem>>, vector<8x32xf32>
    tpu.vector_store %arg11[%54, %c0_19], %53 {strides = array<i32>} : memref<64x32xf32, #tpu.memory_space<vmem>>, vector<8x32xf32>,
    %c2_i32 = arith.constant 2 : i32
    %c8_i32_20 = arith.constant 8 : i32
    %56 = arith.muli %c2_i32, %c8_i32_20 : i32
    %57 = tpu.assume_multiple %56, 8 : i32
    %58 = arith.index_cast %57 : i32 to index
    %c0_21 = arith.constant 0 : index
    %59 = vector.load %arg10[%58, %c0_21] : memref<64x128xf32, #tpu.memory_space<vmem>>, vector<8x128xf32>
    %cst_22 = arith.constant dense<0.000000e+00> : vector<8x128xf32>
    %60 = tpu.matmul %53, %7, %cst_22 {dimension_numbers = #tpu.dot_dimension_numbers<[1], [0], [0], [1], [0, 0, 1, 1], [], []>} : vector<8x32xf32>, vector<32x128xf32>, vector<8x128xf32> -> vector<8x128xf32>
    %61 = arith.addf %59, %60 : vector<8x128xf32>
    %62 = arith.negf %61 : vector<8x128xf32>
    %63 = math.exp %62 : vector<8x128xf32>
    %cst_23 = arith.constant 1.000000e+00 : f32
    %64 = vector.broadcast %cst_23 : f32 to vector<8x128xf32>
    %65 = arith.addf %64, %63 : vector<8x128xf32>
    %66 = arith.divf %64, %65 : vector<8x128xf32>
    %67 = math.tanh %61 : vector<8x128xf32>
    %68 = vector.extract_strided_slice %66 {offsets = [0, 0], sizes = [8, 32], strides = [1, 1]} : vector<8x128xf32> to vector<8x32xf32>
    %69 = vector.extract_strided_slice %66 {offsets = [0, 32], sizes = [8, 32], strides = [1, 1]} : vector<8x128xf32> to vector<8x32xf32>
    %70 = vector.extract_strided_slice %67 {offsets = [0, 64], sizes = [8, 32], strides = [1, 1]} : vector<8x128xf32> to vector<8x32xf32>
    %71 = vector.extract_strided_slice %66 {offsets = [0, 96], sizes = [8, 32], strides = [1, 1]} : vector<8x128xf32> to vector<8x32xf32>
    %72 = arith.mulf %69, %51 : vector<8x32xf32>
    %73 = arith.mulf %68, %70 : vector<8x32xf32>
    %74 = arith.addf %72, %73 : vector<8x32xf32>
    %75 = math.tanh %74 : vector<8x32xf32>
    %76 = arith.mulf %71, %75 : vector<8x32xf32>
    %77 = arith.index_cast %57 : i32 to index
    %c0_24 = arith.constant 0 : index
    %78 = vector.load %arg11[%77, %c0_24] : memref<64x32xf32, #tpu.memory_space<vmem>>, vector<8x32xf32>
    tpu.vector_store %arg11[%77, %c0_24], %76 {strides = array<i32>} : memref<64x32xf32, #tpu.memory_space<vmem>>, vector<8x32xf32>,
    %c3_i32 = arith.constant 3 : i32
    %c8_i32_25 = arith.constant 8 : i32
    %79 = arith.muli %c3_i32, %c8_i32_25 : i32
    %80 = tpu.assume_multiple %79, 8 : i32
    %81 = arith.index_cast %80 : i32 to index
    %c0_26 = arith.constant 0 : index
    %82 = vector.load %arg10[%81, %c0_26] : memref<64x128xf32, #tpu.memory_space<vmem>>, vector<8x128xf32>
    %cst_27 = arith.constant dense<0.000000e+00> : vector<8x128xf32>
    %83 = tpu.matmul %76, %7, %cst_27 {dimension_numbers = #tpu.dot_dimension_numbers<[1], [0], [0], [1], [0, 0, 1, 1], [], []>} : vector<8x32xf32>, vector<32x128xf32>, vector<8x128xf32> -> vector<8x128xf32>
    %84 = arith.addf %82, %83 : vector<8x128xf32>
    %85 = arith.negf %84 : vector<8x128xf32>
    %86 = math.exp %85 : vector<8x128xf32>
    %cst_28 = arith.constant 1.000000e+00 : f32
    %87 = vector.broadcast %cst_28 : f32 to vector<8x128xf32>
    %88 = arith.addf %87, %86 : vector<8x128xf32>
    %89 = arith.divf %87, %88 : vector<8x128xf32>
    %90 = math.tanh %84 : vector<8x128xf32>
    %91 = vector.extract_strided_slice %89 {offsets = [0, 0], sizes = [8, 32], strides = [1, 1]} : vector<8x128xf32> to vector<8x32xf32>
    %92 = vector.extract_strided_slice %89 {offsets = [0, 32], sizes = [8, 32], strides = [1, 1]} : vector<8x128xf32> to vector<8x32xf32>
    %93 = vector.extract_strided_slice %90 {offsets = [0, 64], sizes = [8, 32], strides = [1, 1]} : vector<8x128xf32> to vector<8x32xf32>
    %94 = vector.extract_strided_slice %89 {offsets = [0, 96], sizes = [8, 32], strides = [1, 1]} : vector<8x128xf32> to vector<8x32xf32>
    %95 = arith.mulf %92, %74 : vector<8x32xf32>
    %96 = arith.mulf %91, %93 : vector<8x32xf32>
    %97 = arith.addf %95, %96 : vector<8x32xf32>
    %98 = math.tanh %97 : vector<8x32xf32>
    %99 = arith.mulf %94, %98 : vector<8x32xf32>
    %100 = arith.index_cast %80 : i32 to index
    %c0_29 = arith.constant 0 : index
    %101 = vector.load %arg11[%100, %c0_29] : memref<64x32xf32, #tpu.memory_space<vmem>>, vector<8x32xf32>
    tpu.vector_store %arg11[%100, %c0_29], %99 {strides = array<i32>} : memref<64x32xf32, #tpu.memory_space<vmem>>, vector<8x32xf32>,
    %c4_i32 = arith.constant 4 : i32
    %c8_i32_30 = arith.constant 8 : i32
    %102 = arith.muli %c4_i32, %c8_i32_30 : i32
    %103 = tpu.assume_multiple %102, 8 : i32
    %104 = arith.index_cast %103 : i32 to index
    %c0_31 = arith.constant 0 : index
    %105 = vector.load %arg10[%104, %c0_31] : memref<64x128xf32, #tpu.memory_space<vmem>>, vector<8x128xf32>
    %cst_32 = arith.constant dense<0.000000e+00> : vector<8x128xf32>
    %106 = tpu.matmul %99, %7, %cst_32 {dimension_numbers = #tpu.dot_dimension_numbers<[1], [0], [0], [1], [0, 0, 1, 1], [], []>} : vector<8x32xf32>, vector<32x128xf32>, vector<8x128xf32> -> vector<8x128xf32>
    %107 = arith.addf %105, %106 : vector<8x128xf32>
    %108 = arith.negf %107 : vector<8x128xf32>
    %109 = math.exp %108 : vector<8x128xf32>
    %cst_33 = arith.constant 1.000000e+00 : f32
    %110 = vector.broadcast %cst_33 : f32 to vector<8x128xf32>
    %111 = arith.addf %110, %109 : vector<8x128xf32>
    %112 = arith.divf %110, %111 : vector<8x128xf32>
    %113 = math.tanh %107 : vector<8x128xf32>
    %114 = vector.extract_strided_slice %112 {offsets = [0, 0], sizes = [8, 32], strides = [1, 1]} : vector<8x128xf32> to vector<8x32xf32>
    %115 = vector.extract_strided_slice %112 {offsets = [0, 32], sizes = [8, 32], strides = [1, 1]} : vector<8x128xf32> to vector<8x32xf32>
    %116 = vector.extract_strided_slice %113 {offsets = [0, 64], sizes = [8, 32], strides = [1, 1]} : vector<8x128xf32> to vector<8x32xf32>
    %117 = vector.extract_strided_slice %112 {offsets = [0, 96], sizes = [8, 32], strides = [1, 1]} : vector<8x128xf32> to vector<8x32xf32>
    %118 = arith.mulf %115, %97 : vector<8x32xf32>
    %119 = arith.mulf %114, %116 : vector<8x32xf32>
    %120 = arith.addf %118, %119 : vector<8x32xf32>
    %121 = math.tanh %120 : vector<8x32xf32>
    %122 = arith.mulf %117, %121 : vector<8x32xf32>
    %123 = arith.index_cast %103 : i32 to index
    %c0_34 = arith.constant 0 : index
    %124 = vector.load %arg11[%123, %c0_34] : memref<64x32xf32, #tpu.memory_space<vmem>>, vector<8x32xf32>
    tpu.vector_store %arg11[%123, %c0_34], %122 {strides = array<i32>} : memref<64x32xf32, #tpu.memory_space<vmem>>, vector<8x32xf32>,
    %c5_i32 = arith.constant 5 : i32
    %c8_i32_35 = arith.constant 8 : i32
    %125 = arith.muli %c5_i32, %c8_i32_35 : i32
    %126 = tpu.assume_multiple %125, 8 : i32
    %127 = arith.index_cast %126 : i32 to index
    %c0_36 = arith.constant 0 : index
    %128 = vector.load %arg10[%127, %c0_36] : memref<64x128xf32, #tpu.memory_space<vmem>>, vector<8x128xf32>
    %cst_37 = arith.constant dense<0.000000e+00> : vector<8x128xf32>
    %129 = tpu.matmul %122, %7, %cst_37 {dimension_numbers = #tpu.dot_dimension_numbers<[1], [0], [0], [1], [0, 0, 1, 1], [], []>} : vector<8x32xf32>, vector<32x128xf32>, vector<8x128xf32> -> vector<8x128xf32>
    %130 = arith.addf %128, %129 : vector<8x128xf32>
    %131 = arith.negf %130 : vector<8x128xf32>
    %132 = math.exp %131 : vector<8x128xf32>
    %cst_38 = arith.constant 1.000000e+00 : f32
    %133 = vector.broadcast %cst_38 : f32 to vector<8x128xf32>
    %134 = arith.addf %133, %132 : vector<8x128xf32>
    %135 = arith.divf %133, %134 : vector<8x128xf32>
    %136 = math.tanh %130 : vector<8x128xf32>
    %137 = vector.extract_strided_slice %135 {offsets = [0, 0], sizes = [8, 32], strides = [1, 1]} : vector<8x128xf32> to vector<8x32xf32>
    %138 = vector.extract_strided_slice %135 {offsets = [0, 32], sizes = [8, 32], strides = [1, 1]} : vector<8x128xf32> to vector<8x32xf32>
    %139 = vector.extract_strided_slice %136 {offsets = [0, 64], sizes = [8, 32], strides = [1, 1]} : vector<8x128xf32> to vector<8x32xf32>
    %140 = vector.extract_strided_slice %135 {offsets = [0, 96], sizes = [8, 32], strides = [1, 1]} : vector<8x128xf32> to vector<8x32xf32>
    %141 = arith.mulf %138, %120 : vector<8x32xf32>
    %142 = arith.mulf %137, %139 : vector<8x32xf32>
    %143 = arith.addf %141, %142 : vector<8x32xf32>
    %144 = math.tanh %143 : vector<8x32xf32>
    %145 = arith.mulf %140, %144 : vector<8x32xf32>
    %146 = arith.index_cast %126 : i32 to index
    %c0_39 = arith.constant 0 : index
    %147 = vector.load %arg11[%146, %c0_39] : memref<64x32xf32, #tpu.memory_space<vmem>>, vector<8x32xf32>
    tpu.vector_store %arg11[%146, %c0_39], %145 {strides = array<i32>} : memref<64x32xf32, #tpu.memory_space<vmem>>, vector<8x32xf32>,
    %c6_i32 = arith.constant 6 : i32
    %c8_i32_40 = arith.constant 8 : i32
    %148 = arith.muli %c6_i32, %c8_i32_40 : i32
    %149 = tpu.assume_multiple %148, 8 : i32
    %150 = arith.index_cast %149 : i32 to index
    %c0_41 = arith.constant 0 : index
    %151 = vector.load %arg10[%150, %c0_41] : memref<64x128xf32, #tpu.memory_space<vmem>>, vector<8x128xf32>
    %cst_42 = arith.constant dense<0.000000e+00> : vector<8x128xf32>
    %152 = tpu.matmul %145, %7, %cst_42 {dimension_numbers = #tpu.dot_dimension_numbers<[1], [0], [0], [1], [0, 0, 1, 1], [], []>} : vector<8x32xf32>, vector<32x128xf32>, vector<8x128xf32> -> vector<8x128xf32>
    %153 = arith.addf %151, %152 : vector<8x128xf32>
    %154 = arith.negf %153 : vector<8x128xf32>
    %155 = math.exp %154 : vector<8x128xf32>
    %cst_43 = arith.constant 1.000000e+00 : f32
    %156 = vector.broadcast %cst_43 : f32 to vector<8x128xf32>
    %157 = arith.addf %156, %155 : vector<8x128xf32>
    %158 = arith.divf %156, %157 : vector<8x128xf32>
    %159 = math.tanh %153 : vector<8x128xf32>
    %160 = vector.extract_strided_slice %158 {offsets = [0, 0], sizes = [8, 32], strides = [1, 1]} : vector<8x128xf32> to vector<8x32xf32>
    %161 = vector.extract_strided_slice %158 {offsets = [0, 32], sizes = [8, 32], strides = [1, 1]} : vector<8x128xf32> to vector<8x32xf32>
    %162 = vector.extract_strided_slice %159 {offsets = [0, 64], sizes = [8, 32], strides = [1, 1]} : vector<8x128xf32> to vector<8x32xf32>
    %163 = vector.extract_strided_slice %158 {offsets = [0, 96], sizes = [8, 32], strides = [1, 1]} : vector<8x128xf32> to vector<8x32xf32>
    %164 = arith.mulf %161, %143 : vector<8x32xf32>
    %165 = arith.mulf %160, %162 : vector<8x32xf32>
    %166 = arith.addf %164, %165 : vector<8x32xf32>
    %167 = math.tanh %166 : vector<8x32xf32>
    %168 = arith.mulf %163, %167 : vector<8x32xf32>
    %169 = arith.index_cast %149 : i32 to index
    %c0_44 = arith.constant 0 : index
    %170 = vector.load %arg11[%169, %c0_44] : memref<64x32xf32, #tpu.memory_space<vmem>>, vector<8x32xf32>
    tpu.vector_store %arg11[%169, %c0_44], %168 {strides = array<i32>} : memref<64x32xf32, #tpu.memory_space<vmem>>, vector<8x32xf32>,
    %c7_i32 = arith.constant 7 : i32
    %c8_i32_45 = arith.constant 8 : i32
    %171 = arith.muli %c7_i32, %c8_i32_45 : i32
    %172 = tpu.assume_multiple %171, 8 : i32
    %173 = arith.index_cast %172 : i32 to index
    %c0_46 = arith.constant 0 : index
    %174 = vector.load %arg10[%173, %c0_46] : memref<64x128xf32, #tpu.memory_space<vmem>>, vector<8x128xf32>
    %cst_47 = arith.constant dense<0.000000e+00> : vector<8x128xf32>
    %175 = tpu.matmul %168, %7, %cst_47 {dimension_numbers = #tpu.dot_dimension_numbers<[1], [0], [0], [1], [0, 0, 1, 1], [], []>} : vector<8x32xf32>, vector<32x128xf32>, vector<8x128xf32> -> vector<8x128xf32>
    %176 = arith.addf %174, %175 : vector<8x128xf32>
    %177 = arith.negf %176 : vector<8x128xf32>
    %178 = math.exp %177 : vector<8x128xf32>
    %cst_48 = arith.constant 1.000000e+00 : f32
    %179 = vector.broadcast %cst_48 : f32 to vector<8x128xf32>
    %180 = arith.addf %179, %178 : vector<8x128xf32>
    %181 = arith.divf %179, %180 : vector<8x128xf32>
    %182 = math.tanh %176 : vector<8x128xf32>
    %183 = vector.extract_strided_slice %181 {offsets = [0, 0], sizes = [8, 32], strides = [1, 1]} : vector<8x128xf32> to vector<8x32xf32>
    %184 = vector.extract_strided_slice %181 {offsets = [0, 32], sizes = [8, 32], strides = [1, 1]} : vector<8x128xf32> to vector<8x32xf32>
    %185 = vector.extract_strided_slice %182 {offsets = [0, 64], sizes = [8, 32], strides = [1, 1]} : vector<8x128xf32> to vector<8x32xf32>
    %186 = vector.extract_strided_slice %181 {offsets = [0, 96], sizes = [8, 32], strides = [1, 1]} : vector<8x128xf32> to vector<8x32xf32>
    %187 = arith.mulf %184, %166 : vector<8x32xf32>
    %188 = arith.mulf %183, %185 : vector<8x32xf32>
    %189 = arith.addf %187, %188 : vector<8x32xf32>
    %190 = math.tanh %189 : vector<8x32xf32>
    %191 = arith.mulf %186, %190 : vector<8x32xf32>
    %192 = arith.index_cast %172 : i32 to index
    %c0_49 = arith.constant 0 : index
    %193 = vector.load %arg11[%192, %c0_49] : memref<64x32xf32, #tpu.memory_space<vmem>>, vector<8x32xf32>
    tpu.vector_store %arg11[%192, %c0_49], %191 {strides = array<i32>} : memref<64x32xf32, #tpu.memory_space<vmem>>, vector<8x32xf32>,
    %c8_i32_50 = arith.constant 8 : i32
    %c0_51 = arith.constant 0 : index
    %c0_52 = arith.constant 0 : index
    %194 = vector.load %arg11[%c0_51, %c0_52] : memref<64x32xf32, #tpu.memory_space<vmem>>, vector<64x32xf32>
    %c0_53 = arith.constant 0 : index
    %c0_54 = arith.constant 0 : index
    %195 = vector.load %arg4[%c0_53, %c0_54] : memref<32x128xf32, #tpu.memory_space<vmem>>, vector<32x128xf32>
    %cst_55 = arith.constant dense<0.000000e+00> : vector<64x128xf32>
    %196 = tpu.matmul %194, %195, %cst_55 {dimension_numbers = #tpu.dot_dimension_numbers<[1], [0], [0], [1], [0, 0, 1, 1], [], []>} : vector<64x32xf32>, vector<32x128xf32>, vector<64x128xf32> -> vector<64x128xf32>
    %c0_56 = arith.constant 0 : index
    %c0_57 = arith.constant 0 : index
    %197 = vector.load %arg6[%c0_56, %c0_57] : memref<1x128xf32, #tpu.memory_space<vmem>>, vector<1x128xf32>
    %198 = vector.broadcast %197 : vector<1x128xf32> to vector<64x128xf32>
    %199 = arith.addf %196, %198 : vector<64x128xf32>
    %c0_58 = arith.constant 0 : index
    %c0_59 = arith.constant 0 : index
    %200 = vector.load %arg10[%c0_58, %c0_59] : memref<64x128xf32, #tpu.memory_space<vmem>>, vector<64x128xf32>
    tpu.vector_store %arg10[%c0_58, %c0_59], %199 {strides = array<i32>} : memref<64x128xf32, #tpu.memory_space<vmem>>, vector<64x128xf32>,
    %c0_60 = arith.constant 0 : index
    %c0_61 = arith.constant 0 : index
    %201 = vector.load %arg5[%c0_60, %c0_61] : memref<32x128xf32, #tpu.memory_space<vmem>>, vector<32x128xf32>
    %cst_62 = arith.constant 0.000000e+00 : f32
    %202 = vector.broadcast %cst_62 : f32 to vector<8x32xf32>
    %cst_63 = arith.constant 0.000000e+00 : f32
    %203 = vector.broadcast %cst_63 : f32 to vector<8x32xf32>
    %c0_i32_64 = arith.constant 0 : i32
    %c8_i32_65 = arith.constant 8 : i32
    %204 = arith.muli %c0_i32_64, %c8_i32_65 : i32
    %205 = tpu.assume_multiple %204, 8 : i32
    %206 = arith.index_cast %205 : i32 to index
    %c0_66 = arith.constant 0 : index
    %207 = vector.load %arg10[%206, %c0_66] : memref<64x128xf32, #tpu.memory_space<vmem>>, vector<8x128xf32>
    %cst_67 = arith.constant dense<0.000000e+00> : vector<8x128xf32>
    %208 = tpu.matmul %202, %201, %cst_67 {dimension_numbers = #tpu.dot_dimension_numbers<[1], [0], [0], [1], [0, 0, 1, 1], [], []>} : vector<8x32xf32>, vector<32x128xf32>, vector<8x128xf32> -> vector<8x128xf32>
    %209 = arith.addf %207, %208 : vector<8x128xf32>
    %210 = arith.negf %209 : vector<8x128xf32>
    %211 = math.exp %210 : vector<8x128xf32>
    %cst_68 = arith.constant 1.000000e+00 : f32
    %212 = vector.broadcast %cst_68 : f32 to vector<8x128xf32>
    %213 = arith.addf %212, %211 : vector<8x128xf32>
    %214 = arith.divf %212, %213 : vector<8x128xf32>
    %215 = math.tanh %209 : vector<8x128xf32>
    %216 = vector.extract_strided_slice %214 {offsets = [0, 0], sizes = [8, 32], strides = [1, 1]} : vector<8x128xf32> to vector<8x32xf32>
    %217 = vector.extract_strided_slice %214 {offsets = [0, 32], sizes = [8, 32], strides = [1, 1]} : vector<8x128xf32> to vector<8x32xf32>
    %218 = vector.extract_strided_slice %215 {offsets = [0, 64], sizes = [8, 32], strides = [1, 1]} : vector<8x128xf32> to vector<8x32xf32>
    %219 = vector.extract_strided_slice %214 {offsets = [0, 96], sizes = [8, 32], strides = [1, 1]} : vector<8x128xf32> to vector<8x32xf32>
    %220 = arith.mulf %217, %203 : vector<8x32xf32>
    %221 = arith.mulf %216, %218 : vector<8x32xf32>
    %222 = arith.addf %220, %221 : vector<8x32xf32>
    %223 = math.tanh %222 : vector<8x32xf32>
    %224 = arith.mulf %219, %223 : vector<8x32xf32>
    %225 = arith.index_cast %205 : i32 to index
    %c0_69 = arith.constant 0 : index
    %226 = vector.load %arg11[%225, %c0_69] : memref<64x32xf32, #tpu.memory_space<vmem>>, vector<8x32xf32>
    tpu.vector_store %arg11[%225, %c0_69], %224 {strides = array<i32>} : memref<64x32xf32, #tpu.memory_space<vmem>>, vector<8x32xf32>,
    %c1_i32_70 = arith.constant 1 : i32
    %c8_i32_71 = arith.constant 8 : i32
    %227 = arith.muli %c1_i32_70, %c8_i32_71 : i32
    %228 = tpu.assume_multiple %227, 8 : i32
    %229 = arith.index_cast %228 : i32 to index
    %c0_72 = arith.constant 0 : index
    %230 = vector.load %arg10[%229, %c0_72] : memref<64x128xf32, #tpu.memory_space<vmem>>, vector<8x128xf32>
    %cst_73 = arith.constant dense<0.000000e+00> : vector<8x128xf32>
    %231 = tpu.matmul %224, %201, %cst_73 {dimension_numbers = #tpu.dot_dimension_numbers<[1], [0], [0], [1], [0, 0, 1, 1], [], []>} : vector<8x32xf32>, vector<32x128xf32>, vector<8x128xf32> -> vector<8x128xf32>
    %232 = arith.addf %230, %231 : vector<8x128xf32>
    %233 = arith.negf %232 : vector<8x128xf32>
    %234 = math.exp %233 : vector<8x128xf32>
    %cst_74 = arith.constant 1.000000e+00 : f32
    %235 = vector.broadcast %cst_74 : f32 to vector<8x128xf32>
    %236 = arith.addf %235, %234 : vector<8x128xf32>
    %237 = arith.divf %235, %236 : vector<8x128xf32>
    %238 = math.tanh %232 : vector<8x128xf32>
    %239 = vector.extract_strided_slice %237 {offsets = [0, 0], sizes = [8, 32], strides = [1, 1]} : vector<8x128xf32> to vector<8x32xf32>
    %240 = vector.extract_strided_slice %237 {offsets = [0, 32], sizes = [8, 32], strides = [1, 1]} : vector<8x128xf32> to vector<8x32xf32>
    %241 = vector.extract_strided_slice %238 {offsets = [0, 64], sizes = [8, 32], strides = [1, 1]} : vector<8x128xf32> to vector<8x32xf32>
    %242 = vector.extract_strided_slice %237 {offsets = [0, 96], sizes = [8, 32], strides = [1, 1]} : vector<8x128xf32> to vector<8x32xf32>
    %243 = arith.mulf %240, %222 : vector<8x32xf32>
    %244 = arith.mulf %239, %241 : vector<8x32xf32>
    %245 = arith.addf %243, %244 : vector<8x32xf32>
    %246 = math.tanh %245 : vector<8x32xf32>
    %247 = arith.mulf %242, %246 : vector<8x32xf32>
    %248 = arith.index_cast %228 : i32 to index
    %c0_75 = arith.constant 0 : index
    %249 = vector.load %arg11[%248, %c0_75] : memref<64x32xf32, #tpu.memory_space<vmem>>, vector<8x32xf32>
    tpu.vector_store %arg11[%248, %c0_75], %247 {strides = array<i32>} : memref<64x32xf32, #tpu.memory_space<vmem>>, vector<8x32xf32>,
    %c2_i32_76 = arith.constant 2 : i32
    %c8_i32_77 = arith.constant 8 : i32
    %250 = arith.muli %c2_i32_76, %c8_i32_77 : i32
    %251 = tpu.assume_multiple %250, 8 : i32
    %252 = arith.index_cast %251 : i32 to index
    %c0_78 = arith.constant 0 : index
    %253 = vector.load %arg10[%252, %c0_78] : memref<64x128xf32, #tpu.memory_space<vmem>>, vector<8x128xf32>
    %cst_79 = arith.constant dense<0.000000e+00> : vector<8x128xf32>
    %254 = tpu.matmul %247, %201, %cst_79 {dimension_numbers = #tpu.dot_dimension_numbers<[1], [0], [0], [1], [0, 0, 1, 1], [], []>} : vector<8x32xf32>, vector<32x128xf32>, vector<8x128xf32> -> vector<8x128xf32>
    %255 = arith.addf %253, %254 : vector<8x128xf32>
    %256 = arith.negf %255 : vector<8x128xf32>
    %257 = math.exp %256 : vector<8x128xf32>
    %cst_80 = arith.constant 1.000000e+00 : f32
    %258 = vector.broadcast %cst_80 : f32 to vector<8x128xf32>
    %259 = arith.addf %258, %257 : vector<8x128xf32>
    %260 = arith.divf %258, %259 : vector<8x128xf32>
    %261 = math.tanh %255 : vector<8x128xf32>
    %262 = vector.extract_strided_slice %260 {offsets = [0, 0], sizes = [8, 32], strides = [1, 1]} : vector<8x128xf32> to vector<8x32xf32>
    %263 = vector.extract_strided_slice %260 {offsets = [0, 32], sizes = [8, 32], strides = [1, 1]} : vector<8x128xf32> to vector<8x32xf32>
    %264 = vector.extract_strided_slice %261 {offsets = [0, 64], sizes = [8, 32], strides = [1, 1]} : vector<8x128xf32> to vector<8x32xf32>
    %265 = vector.extract_strided_slice %260 {offsets = [0, 96], sizes = [8, 32], strides = [1, 1]} : vector<8x128xf32> to vector<8x32xf32>
    %266 = arith.mulf %263, %245 : vector<8x32xf32>
    %267 = arith.mulf %262, %264 : vector<8x32xf32>
    %268 = arith.addf %266, %267 : vector<8x32xf32>
    %269 = math.tanh %268 : vector<8x32xf32>
    %270 = arith.mulf %265, %269 : vector<8x32xf32>
    %271 = arith.index_cast %251 : i32 to index
    %c0_81 = arith.constant 0 : index
    %272 = vector.load %arg11[%271, %c0_81] : memref<64x32xf32, #tpu.memory_space<vmem>>, vector<8x32xf32>
    tpu.vector_store %arg11[%271, %c0_81], %270 {strides = array<i32>} : memref<64x32xf32, #tpu.memory_space<vmem>>, vector<8x32xf32>,
    %c3_i32_82 = arith.constant 3 : i32
    %c8_i32_83 = arith.constant 8 : i32
    %273 = arith.muli %c3_i32_82, %c8_i32_83 : i32
    %274 = tpu.assume_multiple %273, 8 : i32
    %275 = arith.index_cast %274 : i32 to index
    %c0_84 = arith.constant 0 : index
    %276 = vector.load %arg10[%275, %c0_84] : memref<64x128xf32, #tpu.memory_space<vmem>>, vector<8x128xf32>
    %cst_85 = arith.constant dense<0.000000e+00> : vector<8x128xf32>
    %277 = tpu.matmul %270, %201, %cst_85 {dimension_numbers = #tpu.dot_dimension_numbers<[1], [0], [0], [1], [0, 0, 1, 1], [], []>} : vector<8x32xf32>, vector<32x128xf32>, vector<8x128xf32> -> vector<8x128xf32>
    %278 = arith.addf %276, %277 : vector<8x128xf32>
    %279 = arith.negf %278 : vector<8x128xf32>
    %280 = math.exp %279 : vector<8x128xf32>
    %cst_86 = arith.constant 1.000000e+00 : f32
    %281 = vector.broadcast %cst_86 : f32 to vector<8x128xf32>
    %282 = arith.addf %281, %280 : vector<8x128xf32>
    %283 = arith.divf %281, %282 : vector<8x128xf32>
    %284 = math.tanh %278 : vector<8x128xf32>
    %285 = vector.extract_strided_slice %283 {offsets = [0, 0], sizes = [8, 32], strides = [1, 1]} : vector<8x128xf32> to vector<8x32xf32>
    %286 = vector.extract_strided_slice %283 {offsets = [0, 32], sizes = [8, 32], strides = [1, 1]} : vector<8x128xf32> to vector<8x32xf32>
    %287 = vector.extract_strided_slice %284 {offsets = [0, 64], sizes = [8, 32], strides = [1, 1]} : vector<8x128xf32> to vector<8x32xf32>
    %288 = vector.extract_strided_slice %283 {offsets = [0, 96], sizes = [8, 32], strides = [1, 1]} : vector<8x128xf32> to vector<8x32xf32>
    %289 = arith.mulf %286, %268 : vector<8x32xf32>
    %290 = arith.mulf %285, %287 : vector<8x32xf32>
    %291 = arith.addf %289, %290 : vector<8x32xf32>
    %292 = math.tanh %291 : vector<8x32xf32>
    %293 = arith.mulf %288, %292 : vector<8x32xf32>
    %294 = arith.index_cast %274 : i32 to index
    %c0_87 = arith.constant 0 : index
    %295 = vector.load %arg11[%294, %c0_87] : memref<64x32xf32, #tpu.memory_space<vmem>>, vector<8x32xf32>
    tpu.vector_store %arg11[%294, %c0_87], %293 {strides = array<i32>} : memref<64x32xf32, #tpu.memory_space<vmem>>, vector<8x32xf32>,
    %c4_i32_88 = arith.constant 4 : i32
    %c8_i32_89 = arith.constant 8 : i32
    %296 = arith.muli %c4_i32_88, %c8_i32_89 : i32
    %297 = tpu.assume_multiple %296, 8 : i32
    %298 = arith.index_cast %297 : i32 to index
    %c0_90 = arith.constant 0 : index
    %299 = vector.load %arg10[%298, %c0_90] : memref<64x128xf32, #tpu.memory_space<vmem>>, vector<8x128xf32>
    %cst_91 = arith.constant dense<0.000000e+00> : vector<8x128xf32>
    %300 = tpu.matmul %293, %201, %cst_91 {dimension_numbers = #tpu.dot_dimension_numbers<[1], [0], [0], [1], [0, 0, 1, 1], [], []>} : vector<8x32xf32>, vector<32x128xf32>, vector<8x128xf32> -> vector<8x128xf32>
    %301 = arith.addf %299, %300 : vector<8x128xf32>
    %302 = arith.negf %301 : vector<8x128xf32>
    %303 = math.exp %302 : vector<8x128xf32>
    %cst_92 = arith.constant 1.000000e+00 : f32
    %304 = vector.broadcast %cst_92 : f32 to vector<8x128xf32>
    %305 = arith.addf %304, %303 : vector<8x128xf32>
    %306 = arith.divf %304, %305 : vector<8x128xf32>
    %307 = math.tanh %301 : vector<8x128xf32>
    %308 = vector.extract_strided_slice %306 {offsets = [0, 0], sizes = [8, 32], strides = [1, 1]} : vector<8x128xf32> to vector<8x32xf32>
    %309 = vector.extract_strided_slice %306 {offsets = [0, 32], sizes = [8, 32], strides = [1, 1]} : vector<8x128xf32> to vector<8x32xf32>
    %310 = vector.extract_strided_slice %307 {offsets = [0, 64], sizes = [8, 32], strides = [1, 1]} : vector<8x128xf32> to vector<8x32xf32>
    %311 = vector.extract_strided_slice %306 {offsets = [0, 96], sizes = [8, 32], strides = [1, 1]} : vector<8x128xf32> to vector<8x32xf32>
    %312 = arith.mulf %309, %291 : vector<8x32xf32>
    %313 = arith.mulf %308, %310 : vector<8x32xf32>
    %314 = arith.addf %312, %313 : vector<8x32xf32>
    %315 = math.tanh %314 : vector<8x32xf32>
    %316 = arith.mulf %311, %315 : vector<8x32xf32>
    %317 = arith.index_cast %297 : i32 to index
    %c0_93 = arith.constant 0 : index
    %318 = vector.load %arg11[%317, %c0_93] : memref<64x32xf32, #tpu.memory_space<vmem>>, vector<8x32xf32>
    tpu.vector_store %arg11[%317, %c0_93], %316 {strides = array<i32>} : memref<64x32xf32, #tpu.memory_space<vmem>>, vector<8x32xf32>,
    %c5_i32_94 = arith.constant 5 : i32
    %c8_i32_95 = arith.constant 8 : i32
    %319 = arith.muli %c5_i32_94, %c8_i32_95 : i32
    %320 = tpu.assume_multiple %319, 8 : i32
    %321 = arith.index_cast %320 : i32 to index
    %c0_96 = arith.constant 0 : index
    %322 = vector.load %arg10[%321, %c0_96] : memref<64x128xf32, #tpu.memory_space<vmem>>, vector<8x128xf32>
    %cst_97 = arith.constant dense<0.000000e+00> : vector<8x128xf32>
    %323 = tpu.matmul %316, %201, %cst_97 {dimension_numbers = #tpu.dot_dimension_numbers<[1], [0], [0], [1], [0, 0, 1, 1], [], []>} : vector<8x32xf32>, vector<32x128xf32>, vector<8x128xf32> -> vector<8x128xf32>
    %324 = arith.addf %322, %323 : vector<8x128xf32>
    %325 = arith.negf %324 : vector<8x128xf32>
    %326 = math.exp %325 : vector<8x128xf32>
    %cst_98 = arith.constant 1.000000e+00 : f32
    %327 = vector.broadcast %cst_98 : f32 to vector<8x128xf32>
    %328 = arith.addf %327, %326 : vector<8x128xf32>
    %329 = arith.divf %327, %328 : vector<8x128xf32>
    %330 = math.tanh %324 : vector<8x128xf32>
    %331 = vector.extract_strided_slice %329 {offsets = [0, 0], sizes = [8, 32], strides = [1, 1]} : vector<8x128xf32> to vector<8x32xf32>
    %332 = vector.extract_strided_slice %329 {offsets = [0, 32], sizes = [8, 32], strides = [1, 1]} : vector<8x128xf32> to vector<8x32xf32>
    %333 = vector.extract_strided_slice %330 {offsets = [0, 64], sizes = [8, 32], strides = [1, 1]} : vector<8x128xf32> to vector<8x32xf32>
    %334 = vector.extract_strided_slice %329 {offsets = [0, 96], sizes = [8, 32], strides = [1, 1]} : vector<8x128xf32> to vector<8x32xf32>
    %335 = arith.mulf %332, %314 : vector<8x32xf32>
    %336 = arith.mulf %331, %333 : vector<8x32xf32>
    %337 = arith.addf %335, %336 : vector<8x32xf32>
    %338 = math.tanh %337 : vector<8x32xf32>
    %339 = arith.mulf %334, %338 : vector<8x32xf32>
    %340 = arith.index_cast %320 : i32 to index
    %c0_99 = arith.constant 0 : index
    %341 = vector.load %arg11[%340, %c0_99] : memref<64x32xf32, #tpu.memory_space<vmem>>, vector<8x32xf32>
    tpu.vector_store %arg11[%340, %c0_99], %339 {strides = array<i32>} : memref<64x32xf32, #tpu.memory_space<vmem>>, vector<8x32xf32>,
    %c6_i32_100 = arith.constant 6 : i32
    %c8_i32_101 = arith.constant 8 : i32
    %342 = arith.muli %c6_i32_100, %c8_i32_101 : i32
    %343 = tpu.assume_multiple %342, 8 : i32
    %344 = arith.index_cast %343 : i32 to index
    %c0_102 = arith.constant 0 : index
    %345 = vector.load %arg10[%344, %c0_102] : memref<64x128xf32, #tpu.memory_space<vmem>>, vector<8x128xf32>
    %cst_103 = arith.constant dense<0.000000e+00> : vector<8x128xf32>
    %346 = tpu.matmul %339, %201, %cst_103 {dimension_numbers = #tpu.dot_dimension_numbers<[1], [0], [0], [1], [0, 0, 1, 1], [], []>} : vector<8x32xf32>, vector<32x128xf32>, vector<8x128xf32> -> vector<8x128xf32>
    %347 = arith.addf %345, %346 : vector<8x128xf32>
    %348 = arith.negf %347 : vector<8x128xf32>
    %349 = math.exp %348 : vector<8x128xf32>
    %cst_104 = arith.constant 1.000000e+00 : f32
    %350 = vector.broadcast %cst_104 : f32 to vector<8x128xf32>
    %351 = arith.addf %350, %349 : vector<8x128xf32>
    %352 = arith.divf %350, %351 : vector<8x128xf32>
    %353 = math.tanh %347 : vector<8x128xf32>
    %354 = vector.extract_strided_slice %352 {offsets = [0, 0], sizes = [8, 32], strides = [1, 1]} : vector<8x128xf32> to vector<8x32xf32>
    %355 = vector.extract_strided_slice %352 {offsets = [0, 32], sizes = [8, 32], strides = [1, 1]} : vector<8x128xf32> to vector<8x32xf32>
    %356 = vector.extract_strided_slice %353 {offsets = [0, 64], sizes = [8, 32], strides = [1, 1]} : vector<8x128xf32> to vector<8x32xf32>
    %357 = vector.extract_strided_slice %352 {offsets = [0, 96], sizes = [8, 32], strides = [1, 1]} : vector<8x128xf32> to vector<8x32xf32>
    %358 = arith.mulf %355, %337 : vector<8x32xf32>
    %359 = arith.mulf %354, %356 : vector<8x32xf32>
    %360 = arith.addf %358, %359 : vector<8x32xf32>
    %361 = math.tanh %360 : vector<8x32xf32>
    %362 = arith.mulf %357, %361 : vector<8x32xf32>
    %363 = arith.index_cast %343 : i32 to index
    %c0_105 = arith.constant 0 : index
    %364 = vector.load %arg11[%363, %c0_105] : memref<64x32xf32, #tpu.memory_space<vmem>>, vector<8x32xf32>
    tpu.vector_store %arg11[%363, %c0_105], %362 {strides = array<i32>} : memref<64x32xf32, #tpu.memory_space<vmem>>, vector<8x32xf32>,
    %c7_i32_106 = arith.constant 7 : i32
    %c8_i32_107 = arith.constant 8 : i32
    %365 = arith.muli %c7_i32_106, %c8_i32_107 : i32
    %366 = tpu.assume_multiple %365, 8 : i32
    %367 = arith.index_cast %366 : i32 to index
    %c0_108 = arith.constant 0 : index
    %368 = vector.load %arg10[%367, %c0_108] : memref<64x128xf32, #tpu.memory_space<vmem>>, vector<8x128xf32>
    %cst_109 = arith.constant dense<0.000000e+00> : vector<8x128xf32>
    %369 = tpu.matmul %362, %201, %cst_109 {dimension_numbers = #tpu.dot_dimension_numbers<[1], [0], [0], [1], [0, 0, 1, 1], [], []>} : vector<8x32xf32>, vector<32x128xf32>, vector<8x128xf32> -> vector<8x128xf32>
    %370 = arith.addf %368, %369 : vector<8x128xf32>
    %371 = arith.negf %370 : vector<8x128xf32>
    %372 = math.exp %371 : vector<8x128xf32>
    %cst_110 = arith.constant 1.000000e+00 : f32
    %373 = vector.broadcast %cst_110 : f32 to vector<8x128xf32>
    %374 = arith.addf %373, %372 : vector<8x128xf32>
    %375 = arith.divf %373, %374 : vector<8x128xf32>
    %376 = math.tanh %370 : vector<8x128xf32>
    %377 = vector.extract_strided_slice %375 {offsets = [0, 0], sizes = [8, 32], strides = [1, 1]} : vector<8x128xf32> to vector<8x32xf32>
    %378 = vector.extract_strided_slice %375 {offsets = [0, 32], sizes = [8, 32], strides = [1, 1]} : vector<8x128xf32> to vector<8x32xf32>
    %379 = vector.extract_strided_slice %376 {offsets = [0, 64], sizes = [8, 32], strides = [1, 1]} : vector<8x128xf32> to vector<8x32xf32>
    %380 = vector.extract_strided_slice %375 {offsets = [0, 96], sizes = [8, 32], strides = [1, 1]} : vector<8x128xf32> to vector<8x32xf32>
    %381 = arith.mulf %378, %360 : vector<8x32xf32>
    %382 = arith.mulf %377, %379 : vector<8x32xf32>
    %383 = arith.addf %381, %382 : vector<8x32xf32>
    %384 = math.tanh %383 : vector<8x32xf32>
    %385 = arith.mulf %380, %384 : vector<8x32xf32>
    %386 = arith.index_cast %366 : i32 to index
    %c0_111 = arith.constant 0 : index
    %387 = vector.load %arg11[%386, %c0_111] : memref<64x32xf32, #tpu.memory_space<vmem>>, vector<8x32xf32>
    tpu.vector_store %arg11[%386, %c0_111], %385 {strides = array<i32>} : memref<64x32xf32, #tpu.memory_space<vmem>>, vector<8x32xf32>,
    %c8_i32_112 = arith.constant 8 : i32
    %c0_113 = arith.constant 0 : index
    %c0_114 = arith.constant 0 : index
    %388 = vector.load %arg7[%c0_113, %c0_114] : memref<32x8xf32, #tpu.memory_space<vmem>>, vector<32x8xf32>
    %cst_115 = arith.constant dense<0.000000e+00> : vector<8x8xf32>
    %389 = tpu.matmul %385, %388, %cst_115 {dimension_numbers = #tpu.dot_dimension_numbers<[1], [0], [0], [1], [0, 0, 1, 1], [], []>} : vector<8x32xf32>, vector<32x8xf32>, vector<8x8xf32> -> vector<8x8xf32>
    %c0_116 = arith.constant 0 : index
    %c0_117 = arith.constant 0 : index
    %390 = vector.load %arg8[%c0_116, %c0_117] : memref<1x8xf32, #tpu.memory_space<vmem>>, vector<1x8xf32>
    %391 = vector.broadcast %390 : vector<1x8xf32> to vector<8x8xf32>
    %392 = arith.addf %389, %391 : vector<8x8xf32>
    %c0_118 = arith.constant 0 : index
    %c0_119 = arith.constant 0 : index
    %393 = vector.load %arg9[%c0_118, %c0_119] : memref<8x8xf32, #tpu.memory_space<vmem>>, vector<8x8xf32>
    tpu.vector_store %arg9[%c0_118, %c0_119], %392 {strides = array<i32>} : memref<8x8xf32, #tpu.memory_space<vmem>>, vector<8x8xf32>,
    return
  }
}

</mosaic_0001>

<llo_original>
// kernel: task_config_network_forward.1
$region0: #{task_config_network_forward.1}
  #allocation0 [shape = 'u32[]', space=smem, size = 0x4, offset = 0x4, fixed_abs, tag = 'smem constant byte address 0x4 - core index']
  #allocation1 [shape = 'u32[144,128]{1,0:T(1,128)}', space=vmem, size = 0x12000, scoped, tag = 'internal scratch']
  #allocation2 [shape = 'f32[64,128]{1,0:T(8,128)}', space=vmem, size = 0x8000, scoped, tag = 'scratch operand']
  #allocation3 [shape = 'f32[64,32]{1,0:T(8,128)}', space=vmem, size = 0x8000, scoped, tag = 'scratch operand']
  %s0 = inlined_call_operand.vmem [shape: f32[64,16], index: 0, kind: input, shape index: {}]
  %s1 = inlined_call_operand.vmem [shape: f32[16,128], index: 1, kind: input, shape index: {}]
  %s2 = inlined_call_operand.vmem [shape: f32[32,128], index: 2, kind: input, shape index: {}]
  %s3 = inlined_call_operand.vmem [shape: f32[1,128], index: 3, kind: input, shape index: {}]
  %s4 = inlined_call_operand.vmem [shape: f32[32,128], index: 4, kind: input, shape index: {}]
  %s5 = inlined_call_operand.vmem [shape: f32[32,128], index: 5, kind: input, shape index: {}]
  %s6 = inlined_call_operand.vmem [shape: f32[1,128], index: 6, kind: input, shape index: {}]
  %s7 = inlined_call_operand.vmem [shape: f32[32,8], index: 7, kind: input, shape index: {}]
  %s8 = inlined_call_operand.vmem [shape: f32[1,8], index: 8, kind: input, shape index: {}]
  %s9 = inlined_call_operand.vmem [shape: f32[8,8], index: 9, kind: output, shape index: {}]
  %s10 = sld [smem:[#allocation0]]
  $region46: #{task_config_network_forward.1} parent=0
    _
  %s12 = ssub.s32 1, %s10
  %s13 = scalar_select 0, %s12, %s10
  // Predicated region
  $region2: #{task_config_network_forward.1} parent=0 // pred_check
    _
  $region3: #{task_config_network_forward.1} parent=0 // pred_check_branch
    %15 = sbr.rel (0) target = $region5
  $region4: #{task_config_network_forward.1} parent=0 // pred_region
    _
  $region5: #{task_config_network_forward.1} parent=0 // pred_fallthru
    _
  // Predicated region
  $region6: #{task_config_network_forward.1} parent=0 // pred_check
    _
  $region7: #{task_config_network_forward.1} parent=0 // pred_check_branch
    %17 = sbr.rel (0) target = $region9
  $region8: #{task_config_network_forward.1} parent=0 // pred_region
    _
  $region9: #{task_config_network_forward.1} parent=0 // pred_fallthru
    _
  // Predicated region
  $region10: #{task_config_network_forward.1} parent=0 // pred_check
    _
  $region11: #{task_config_network_forward.1} parent=0 // pred_check_branch
    %19 = sbr.rel (0) target = $region13
  $region12: #{task_config_network_forward.1} parent=0 // pred_region
    _
  $region13: #{task_config_network_forward.1} parent=0 // pred_fallthru
    _
  // Predicated region
  $region14: #{task_config_network_forward.1} parent=0 // pred_check
    _
  $region15: #{task_config_network_forward.1} parent=0 // pred_check_branch
    %21 = sbr.rel (0) target = $region17
  $region16: #{task_config_network_forward.1} parent=0 // pred_region
    _
  $region17: #{task_config_network_forward.1} parent=0 // pred_fallthru
    _
  // Predicated region
  $region18: #{task_config_network_forward.1} parent=0 // pred_check
    _
  $region19: #{task_config_network_forward.1} parent=0 // pred_check_branch
    %23 = sbr.rel (0) target = $region21
  $region20: #{task_config_network_forward.1} parent=0 // pred_region
    _
  $region21: #{task_config_network_forward.1} parent=0 // pred_fallthru
    _
  // Predicated region
  $region22: #{task_config_network_forward.1} parent=0 // pred_check
    _
  $region23: #{task_config_network_forward.1} parent=0 // pred_check_branch
    %25 = sbr.rel (0) target = $region25
  $region24: #{task_config_network_forward.1} parent=0 // pred_region
    _
  $region25: #{task_config_network_forward.1} parent=0 // pred_fallthru
    _
  // Predicated region
  $region26: #{task_config_network_forward.1} parent=0 // pred_check
    _
  $region27: #{task_config_network_forward.1} parent=0 // pred_check_branch
    %27 = sbr.rel (0) target = $region29
  $region28: #{task_config_network_forward.1} parent=0 // pred_region
    _
  $region29: #{task_config_network_forward.1} parent=0 // pred_fallthru
    _
  // Predicated region
  $region30: #{task_config_network_forward.1} parent=0 // pred_check
    _
  $region31: #{task_config_network_forward.1} parent=0 // pred_check_branch
    %29 = sbr.rel (0) target = $region33
  $region32: #{task_config_network_forward.1} parent=0 // pred_region
    _
  $region33: #{task_config_network_forward.1} parent=0 // pred_fallthru
    _
  // Predicated region
  $region34: #{task_config_network_forward.1} parent=0 // pred_check
    _
  $region35: #{task_config_network_forward.1} parent=0 // pred_check_branch
    %31 = sbr.rel (0) target = $region37
  $region36: #{task_config_network_forward.1} parent=0 // pred_region
    _
  $region37: #{task_config_network_forward.1} parent=0 // pred_fallthru
    _
  %v32 = vld [vmem:[%s0] sm:$0xff]
  %v33 = vld [vmem:[%s0 + $0x8] sm:$0xff]
  %v34 = vld [vmem:[%s0 + $0x10] sm:$0xff]
  %v35 = vld [vmem:[%s0 + $0x18] sm:$0xff]
  %v36 = vld [vmem:[%s0 + $0x20] sm:$0xff]
  %v37 = vld [vmem:[%s0 + $0x28] sm:$0xff]
  %v38 = vld [vmem:[%s0 + $0x30] sm:$0xff]
  %v39 = vld [vmem:[%s0 + $0x38] sm:$0xff]
  %v40 = vld [vmem:[%s1] sm:$0xff]
  %v41 = vld [vmem:[%s1 + $0x8] sm:$0xff]
  %v42 = vld [vmem:[%s3] sm:$0x1]
  %v44 = vlaneseq
  %v45 = vshrl.u32 %v44, 7
  %v46 = vsub.s32 0, %v45
  %v47 = vrot.slane %v42, %v46
  %vm49 = vcmask 130048
  %v51 = vsel %vm49, %v32, 0
  %v54 = vsel %vm49, %v33, 0
  %v57 = vsel %vm49, %v34, 0
  %v60 = vsel %vm49, %v35, 0
  %v63 = vsel %vm49, %v36, 0
  %v66 = vsel %vm49, %v37, 0
  %v69 = vsel %vm49, %v38, 0
  %v72 = vsel %vm49, %v39, 0
  %74 = vmatprep.subr.mxu0 0.0
  %75 = vmatpush1.msra.mxu0 %v40
  %76 = vmatprep.subr.mxu0 0.0
  %77 = vmatpush1.msra.mxu0 %v41
  %78 = vmatprep.subr.mxu0 0.0
  %79 = vmatpush1.msra.mxu0 0.0
  %80 = vmatprep.subr.mxu0 0.0
  %81 = vmatpush1.msra.mxu0 0.0
  %82 = vmatprep.subr.mxu0 0.0
  %83 = vmatpush1.msra.mxu0 0.0
  %84 = vmatprep.subr.mxu0 0.0
  %85 = vmatpush1.msra.mxu0 0.0
  %86 = vmatprep.subr.mxu0 0.0
  %87 = vmatpush1.msra.mxu0 0.0
  %88 = vmatprep.subr.mxu0 0.0
  %89 = vmatpush1.msra.mxu0 0.0
  %90 = vmatprep.subr.mxu0 0.0
  %91 = vmatpush1.msra.mxu0 0.0
  %92 = vmatprep.subr.mxu0 0.0
  %93 = vmatpush1.msra.mxu0 0.0
  %94 = vmatprep.subr.mxu0 0.0
  %95 = vmatpush1.msra.mxu0 0.0
  %96 = vmatprep.subr.mxu0 0.0
  %97 = vmatpush1.msra.mxu0 0.0
  %98 = vmatprep.subr.mxu0 0.0
  %99 = vmatpush1.msra.mxu0 0.0
  %100 = vmatprep.subr.mxu0 0.0
  %101 = vmatpush1.msra.mxu0 0.0
  %102 = vmatprep.subr.mxu0 0.0
  %103 = vmatpush1.msra.mxu0 0.0
  %104 = vmatprep.subr.mxu0 0.0
  %105 = vmatpush1.msra.mxu0 0.0
  %106 = vmatprep.subr.mxu0 0.0
  %107 = vmatpush1.msra.mxu0 0.0
  %108 = vmatprep.subr.mxu0 0.0
  %109 = vmatpush1.msra.mxu0 0.0
  %110 = vmatprep.subr.mxu0 0.0
  %111 = vmatpush1.msra.mxu0 0.0
  %112 = vmatprep.subr.mxu0 0.0
  %113 = vmatpush1.msra.mxu0 0.0
  %114 = vmatprep.subr.mxu0 0.0
  %115 = vmatpush1.msra.mxu0 0.0
  %116 = vmatprep.subr.mxu0 0.0
  %117 = vmatpush1.msra.mxu0 0.0
  %118 = vmatprep.subr.mxu0 0.0
  %119 = vmatpush1.msra.mxu0 0.0
  %120 = vmatprep.subr.mxu0 0.0
  %121 = vmatpush1.msra.mxu0 0.0
  %122 = vmatprep.subr.mxu0 0.0
  %123 = vmatpush1.msra.mxu0 0.0
  %124 = vmatprep.subr.mxu0 0.0
  %125 = vmatpush1.msra.mxu0 0.0
  %126 = vmatprep.subr.mxu0 0.0
  %127 = vmatpush1.msra.mxu0 0.0
  %128 = vmatprep.subr.mxu0 0.0
  %129 = vmatpush1.msra.mxu0 0.0
  %130 = vmatprep.subr.mxu0 0.0
  %131 = vmatpush1.msra.mxu0 0.0
  %132 = vmatprep.subr.mxu0 0.0
  %133 = vmatpush1.msra.mxu0 0.0
  %134 = vmatprep.subr.mxu0 0.0
  %135 = vmatpush1.msra.mxu0 0.0
  %136 = vmatprep.subr.mxu0 0.0
  %137 = vmatpush1.msra.mxu0 0.0
  %138 = vmatprep.mubr.f32.mxu0 0.0
  %139 = vmatmul.mubr.f32.gmra.mrb[0].mxu0 %v51
  %v140 = vpop.f32.mrb[0].mxu0
  %v141 = vadd.f32 %v47, %v140
  %v142 = vpop.f32.mrb[0].mxu0
  %143 = vmatprep.mubr.f32.mxu0 0.0
  %144 = vmatmul.mubr.f32.gmra.mrb[0].mxu0 %v54
  %v145 = vpop.f32.mrb[0].mxu0
  %v146 = vadd.f32 %v47, %v145
  %v147 = vpop.f32.mrb[0].mxu0
  %148 = vmatprep.mubr.f32.mxu0 0.0
  %149 = vmatmul.mubr.f32.gmra.mrb[0].mxu0 %v57
  %v150 = vpop.f32.mrb[0].mxu0
  %v151 = vadd.f32 %v47, %v150
  %v152 = vpop.f32.mrb[0].mxu0
  %153 = vmatprep.mubr.f32.mxu0 0.0
  %154 = vmatmul.mubr.f32.gmra.mrb[0].mxu0 %v60
  %v155 = vpop.f32.mrb[0].mxu0
  %v156 = vadd.f32 %v47, %v155
  %v157 = vpop.f32.mrb[0].mxu0
  %158 = vmatprep.mubr.f32.mxu0 0.0
  %159 = vmatmul.mubr.f32.gmra.mrb[0].mxu0 %v63
  %v160 = vpop.f32.mrb[0].mxu0
  %v161 = vadd.f32 %v47, %v160
  %v162 = vpop.f32.mrb[0].mxu0
  %163 = vmatprep.mubr.f32.mxu0 0.0
  %164 = vmatmul.mubr.f32.gmra.mrb[0].mxu0 %v66
  %v165 = vpop.f32.mrb[0].mxu0
  %v166 = vadd.f32 %v47, %v165
  %v167 = vpop.f32.mrb[0].mxu0
  %168 = vmatprep.mubr.f32.mxu0 0.0
  %169 = vmatmul.mubr.f32.gmra.mrb[0].mxu0 %v69
  %v170 = vpop.f32.mrb[0].mxu0
  %v171 = vadd.f32 %v47, %v170
  %v172 = vpop.f32.mrb[0].mxu0
  %173 = vmatprep.mubr.f32.mxu0 0.0
  %174 = vmatmul.mubr.f32.gmra.mrb[0].mxu0 %v72
  %v175 = vpop.f32.mrb[0].mxu0
  %v176 = vadd.f32 %v47, %v175
  %v177 = vpop.f32.mrb[0].mxu0
  %178 = vdwg.mxu0
  %179 = vst [vmem:[#allocation2] sm:$0xff] %v141
  %180 = vst [vmem:[#allocation2 + $0x8] sm:$0xff] %v146
  %181 = vst [vmem:[#allocation2 + $0x10] sm:$0xff] %v151
  %182 = vst [vmem:[#allocation2 + $0x18] sm:$0xff] %v156
  %183 = vst [vmem:[#allocation2 + $0x20] sm:$0xff] %v161
  %184 = vst [vmem:[#allocation2 + $0x28] sm:$0xff] %v166
  %185 = vst [vmem:[#allocation2 + $0x30] sm:$0xff] %v171
  %186 = vst [vmem:[#allocation2 + $0x38] sm:$0xff] %v176
  %v187 = vld [vmem:[%s2] sm:$0xff]
  %v188 = vld [vmem:[%s2 + $0x8] sm:$0xff]
  %v189 = vld [vmem:[%s2 + $0x10] sm:$0xff]
  %v190 = vld [vmem:[%s2 + $0x18] sm:$0xff]
  %v191 = vld [vmem:[#allocation2] sm:$0xff]
  %vm192 = vcmask 261120
  %v194 = vsel %vm192, 0.0, 0
  %196 = vmatprep.subr.mxu0 0.0
  %197 = vmatpush1.msra.mxu0 %v187
  %198 = vmatprep.subr.mxu0 0.0
  %199 = vmatpush1.msra.mxu0 %v188
  %200 = vmatprep.subr.mxu0 0.0
  %201 = vmatpush1.msra.mxu0 %v189
  %202 = vmatprep.subr.mxu0 0.0
  %203 = vmatpush1.msra.mxu0 %v190
  %204 = vmatprep.subr.mxu0 0.0
  %205 = vmatpush1.msra.mxu0 0.0
  %206 = vmatprep.subr.mxu0 0.0
  %207 = vmatpush1.msra.mxu0 0.0
  %208 = vmatprep.subr.mxu0 0.0
  %209 = vmatpush1.msra.mxu0 0.0
  %210 = vmatprep.subr.mxu0 0.0
  %211 = vmatpush1.msra.mxu0 0.0
  %212 = vmatprep.subr.mxu0 0.0
  %213 = vmatpush1.msra.mxu0 0.0
  %214 = vmatprep.subr.mxu0 0.0
  %215 = vmatpush1.msra.mxu0 0.0
  %216 = vmatprep.subr.mxu0 0.0
  %217 = vmatpush1.msra.mxu0 0.0
  %218 = vmatprep.subr.mxu0 0.0
  %219 = vmatpush1.msra.mxu0 0.0
  %220 = vmatprep.subr.mxu0 0.0
  %221 = vmatpush1.msra.mxu0 0.0
  %222 = vmatprep.subr.mxu0 0.0
  %223 = vmatpush1.msra.mxu0 0.0
  %224 = vmatprep.subr.mxu0 0.0
  %225 = vmatpush1.msra.mxu0 0.0
  %226 = vmatprep.subr.mxu0 0.0
  %227 = vmatpush1.msra.mxu0 0.0
  %228 = vmatprep.subr.mxu0 0.0
  %229 = vmatpush1.msra.mxu0 0.0
  %230 = vmatprep.subr.mxu0 0.0
  %231 = vmatpush1.msra.mxu0 0.0
  %232 = vmatprep.subr.mxu0 0.0
  %233 = vmatpush1.msra.mxu0 0.0
  %234 = vmatprep.subr.mxu0 0.0
  %235 = vmatpush1.msra.mxu0 0.0
  %236 = vmatprep.subr.mxu0 0.0
  %237 = vmatpush1.msra.mxu0 0.0
  %238 = vmatprep.subr.mxu0 0.0
  %239 = vmatpush1.msra.mxu0 0.0
  %240 = vmatprep.subr.mxu0 0.0
  %241 = vmatpush1.msra.mxu0 0.0
  %242 = vmatprep.subr.mxu0 0.0
  %243 = vmatpush1.msra.mxu0 0.0
  %244 = vmatprep.subr.mxu0 0.0
  %245 = vmatpush1.msra.mxu0 0.0
  %246 = vmatprep.subr.mxu0 0.0
  %247 = vmatpush1.msra.mxu0 0.0
  %248 = vmatprep.subr.mxu0 0.0
  %249 = vmatpush1.msra.mxu0 0.0
  %250 = vmatprep.subr.mxu0 0.0
  %251 = vmatpush1.msra.mxu0 0.0
  %252 = vmatprep.subr.mxu0 0.0
  %253 = vmatpush1.msra.mxu0 0.0
  %254 = vmatprep.subr.mxu0 0.0
  %255 = vmatpush1.msra.mxu0 0.0
  %256 = vmatprep.subr.mxu0 0.0
  %257 = vmatpush1.msra.mxu0 0.0
  %258 = vmatprep.subr.mxu0 0.0
  %259 = vmatpush1.msra.mxu0 0.0
  %260 = vmatprep.mubr.f32.mxu0 0.0
  %261 = vmatmul.mubr.f32.gmra.mrb[0].mxu0 %v194
  %v262 = vpop.f32.mrb[0].mxu0
  %v263 = vadd.f32 0.0, %v262
  %v264 = vpop.f32.mrb[0].mxu0
  %265 = vdwg.mxu0
  %v266 = vadd.f32 %v191, %v263
  %v267 = vxor.u32 %v266, 2147483648
  %v268 = vmul.f32 %v267, 1.442695
  %v269 = vpow.pop %v268
  %v270 = vadd.f32 %v269, 1.0
  %v271 = vrcp.pop %v270
  %v272 = vmul.f32 1.0, %v271
  %v273 = vtanh.pop %v266
  %v274 = vmul.f32 %v272, 0.0
  %276 = vrot.lane.b32.xlu0 %v273, 64
  %v277 = vpop.permute.xlu0 %276
  %v279 = vmul.f32 %v272, %v277
  %281 = vrot.lane.b32.xlu0 %v279, 32
  %v282 = vpop.permute.xlu0 %281
  %v284 = vadd.f32 %v274, %v282
  %v285 = vtanh.pop %v284
  %287 = vrot.lane.b32.xlu0 %v285, 64
  %v288 = vpop.permute.xlu0 %287
  %v290 = vmul.f32 %v272, %v288
  %292 = vrot.lane.b32.xlu0 %v290, 32
  %v293 = vpop.permute.xlu0 %292
  %295 = vst.msk [vmem:[#allocation3] sm:$0xff] %vm192, %v293
  %s296 = scalar_lea.vmem [#allocation2], 8
  %v297 = vld [vmem:[%s296] sm:$0xff]
  %v298 = vsel %vm192, %v293, 0
  %300 = vmatprep.subr.mxu0 0.0
  %301 = vmatpush1.msra.mxu0 %v187
  %302 = vmatprep.subr.mxu0 0.0
  %303 = vmatpush1.msra.mxu0 %v188
  %304 = vmatprep.subr.mxu0 0.0
  %305 = vmatpush1.msra.mxu0 %v189
  %306 = vmatprep.subr.mxu0 0.0
  %307 = vmatpush1.msra.mxu0 %v190
  %308 = vmatprep.subr.mxu0 0.0
  %309 = vmatpush1.msra.mxu0 0.0
  %310 = vmatprep.subr.mxu0 0.0
  %311 = vmatpush1.msra.mxu0 0.0
  %312 = vmatprep.subr.mxu0 0.0
  %313 = vmatpush1.msra.mxu0 0.0
  %314 = vmatprep.subr.mxu0 0.0
  %315 = vmatpush1.msra.mxu0 0.0
  %316 = vmatprep.subr.mxu0 0.0
  %317 = vmatpush1.msra.mxu0 0.0
  %318 = vmatprep.subr.mxu0 0.0
  %319 = vmatpush1.msra.mxu0 0.0
  %320 = vmatprep.subr.mxu0 0.0
  %321 = vmatpush1.msra.mxu0 0.0
  %322 = vmatprep.subr.mxu0 0.0
  %323 = vmatpush1.msra.mxu0 0.0
  %324 = vmatprep.subr.mxu0 0.0
  %325 = vmatpush1.msra.mxu0 0.0
  %326 = vmatprep.subr.mxu0 0.0
  %327 = vmatpush1.msra.mxu0 0.0
  %328 = vmatprep.subr.mxu0 0.0
  %329 = vmatpush1.msra.mxu0 0.0
  %330 = vmatprep.subr.mxu0 0.0
  %331 = vmatpush1.msra.mxu0 0.0
  %332 = vmatprep.subr.mxu0 0.0
  %333 = vmatpush1.msra.mxu0 0.0
  %334 = vmatprep.subr.mxu0 0.0
  %335 = vmatpush1.msra.mxu0 0.0
  %336 = vmatprep.subr.mxu0 0.0
  %337 = vmatpush1.msra.mxu0 0.0
  %338 = vmatprep.subr.mxu0 0.0
  %339 = vmatpush1.msra.mxu0 0.0
  %340 = vmatprep.subr.mxu0 0.0
  %341 = vmatpush1.msra.mxu0 0.0
  %342 = vmatprep.subr.mxu0 0.0
  %343 = vmatpush1.msra.mxu0 0.0
  %344 = vmatprep.subr.mxu0 0.0
  %345 = vmatpush1.msra.mxu0 0.0
  %346 = vmatprep.subr.mxu0 0.0
  %347 = vmatpush1.msra.mxu0 0.0
  %348 = vmatprep.subr.mxu0 0.0
  %349 = vmatpush1.msra.mxu0 0.0
  %350 = vmatprep.subr.mxu0 0.0
  %351 = vmatpush1.msra.mxu0 0.0
  %352 = vmatprep.subr.mxu0 0.0
  %353 = vmatpush1.msra.mxu0 0.0
  %354 = vmatprep.subr.mxu0 0.0
  %355 = vmatpush1.msra.mxu0 0.0
  %356 = vmatprep.subr.mxu0 0.0
  %357 = vmatpush1.msra.mxu0 0.0
  %358 = vmatprep.subr.mxu0 0.0
  %359 = vmatpush1.msra.mxu0 0.0
  %360 = vmatprep.subr.mxu0 0.0
  %361 = vmatpush1.msra.mxu0 0.0
  %362 = vmatprep.subr.mxu0 0.0
  %363 = vmatpush1.msra.mxu0 0.0
  %364 = vmatprep.mubr.f32.mxu0 0.0
  %365 = vmatmul.mubr.f32.gmra.mrb[0].mxu0 %v298
  %v366 = vpop.f32.mrb[0].mxu0
  %v367 = vadd.f32 0.0, %v366
  %v368 = vpop.f32.mrb[0].mxu0
  %369 = vdwg.mxu0
  %v370 = vadd.f32 %v297, %v367
  %v371 = vxor.u32 %v370, 2147483648
  %v372 = vmul.f32 %v371, 1.442695
  %v373 = vpow.pop %v372
  %v374 = vadd.f32 %v373, 1.0
  %v375 = vrcp.pop %v374
  %v376 = vmul.f32 1.0, %v375
  %v377 = vtanh.pop %v370
  %v378 = vmul.f32 %v376, %v284
  %380 = vrot.lane.b32.xlu0 %v377, 64
  %v381 = vpop.permute.xlu0 %380
  %v383 = vmul.f32 %v376, %v381
  %385 = vrot.lane.b32.xlu0 %v383, 32
  %v386 = vpop.permute.xlu0 %385
  %v388 = vadd.f32 %v378, %v386
  %v389 = vtanh.pop %v388
  %391 = vrot.lane.b32.xlu0 %v389, 64
  %v392 = vpop.permute.xlu0 %391
  %v394 = vmul.f32 %v376, %v392
  %396 = vrot.lane.b32.xlu0 %v394, 32
  %v397 = vpop.permute.xlu0 %396
  %s399 = scalar_lea.vmem [#allocation3], 8
  %400 = vst.msk [vmem:[%s399] sm:$0xff] %vm192, %v397
  %s401 = scalar_lea.vmem [#allocation2], 16
  %v402 = vld [vmem:[%s401] sm:$0xff]
  %v403 = vsel %vm192, %v397, 0
  %405 = vmatprep.subr.mxu0 0.0
  %406 = vmatpush1.msra.mxu0 %v187
  %407 = vmatprep.subr.mxu0 0.0
  %408 = vmatpush1.msra.mxu0 %v188
  %409 = vmatprep.subr.mxu0 0.0
  %410 = vmatpush1.msra.mxu0 %v189
  %411 = vmatprep.subr.mxu0 0.0
  %412 = vmatpush1.msra.mxu0 %v190
  %413 = vmatprep.subr.mxu0 0.0
  %414 = vmatpush1.msra.mxu0 0.0
  %415 = vmatprep.subr.mxu0 0.0
  %416 = vmatpush1.msra.mxu0 0.0
  %417 = vmatprep.subr.mxu0 0.0
  %418 = vmatpush1.msra.mxu0 0.0
  %419 = vmatprep.subr.mxu0 0.0
  %420 = vmatpush1.msra.mxu0 0.0
  %421 = vmatprep.subr.mxu0 0.0
  %422 = vmatpush1.msra.mxu0 0.0
  %423 = vmatprep.subr.mxu0 0.0
  %424 = vmatpush1.msra.mxu0 0.0
  %425 = vmatprep.subr.mxu0 0.0
  %426 = vmatpush1.msra.mxu0 0.0
  %427 = vmatprep.subr.mxu0 0.0
  %428 = vmatpush1.msra.mxu0 0.0
  %429 = vmatprep.subr.mxu0 0.0
  %430 = vmatpush1.msra.mxu0 0.0
  %431 = vmatprep.subr.mxu0 0.0
  %432 = vmatpush1.msra.mxu0 0.0
  %433 = vmatprep.subr.mxu0 0.0
  %434 = vmatpush1.msra.mxu0 0.0
  %435 = vmatprep.subr.mxu0 0.0
  %436 = vmatpush1.msra.mxu0 0.0
  %437 = vmatprep.subr.mxu0 0.0
  %438 = vmatpush1.msra.mxu0 0.0
  %439 = vmatprep.subr.mxu0 0.0
  %440 = vmatpush1.msra.mxu0 0.0
  %441 = vmatprep.subr.mxu0 0.0
  %442 = vmatpush1.msra.mxu0 0.0
  %443 = vmatprep.subr.mxu0 0.0
  %444 = vmatpush1.msra.mxu0 0.0
  %445 = vmatprep.subr.mxu0 0.0
  %446 = vmatpush1.msra.mxu0 0.0
  %447 = vmatprep.subr.mxu0 0.0
  %448 = vmatpush1.msra.mxu0 0.0
  %449 = vmatprep.subr.mxu0 0.0
  %450 = vmatpush1.msra.mxu0 0.0
  %451 = vmatprep.subr.mxu0 0.0
  %452 = vmatpush1.msra.mxu0 0.0
  %453 = vmatprep.subr.mxu0 0.0
  %454 = vmatpush1.msra.mxu0 0.0
  %455 = vmatprep.subr.mxu0 0.0
  %456 = vmatpush1.msra.mxu0 0.0
  %457 = vmatprep.subr.mxu0 0.0
  %458 = vmatpush1.msra.mxu0 0.0
  %459 = vmatprep.subr.mxu0 0.0
  %460 = vmatpush1.msra.mxu0 0.0
  %461 = vmatprep.subr.mxu0 0.0
  %462 = vmatpush1.msra.mxu0 0.0
  %463 = vmatprep.subr.mxu0 0.0
  %464 = vmatpush1.msra.mxu0 0.0
  %465 = vmatprep.subr.mxu0 0.0
  %466 = vmatpush1.msra.mxu0 0.0
  %467 = vmatprep.subr.mxu0 0.0
  %468 = vmatpush1.msra.mxu0 0.0
  %469 = vmatprep.mubr.f32.mxu0 0.0
  %470 = vmatmul.mubr.f32.gmra.mrb[0].mxu0 %v403
  %v471 = vpop.f32.mrb[0].mxu0
  %v472 = vadd.f32 0.0, %v471
  %v473 = vpop.f32.mrb[0].mxu0
  %474 = vdwg.mxu0
  %v475 = vadd.f32 %v402, %v472
  %v476 = vxor.u32 %v475, 2147483648
  %v477 = vmul.f32 %v476, 1.442695
  %v478 = vpow.pop %v477
  %v479 = vadd.f32 %v478, 1.0
  %v480 = vrcp.pop %v479
  %v481 = vmul.f32 1.0, %v480
  %v482 = vtanh.pop %v475
  %v483 = vmul.f32 %v481, %v388
  %485 = vrot.lane.b32.xlu0 %v482, 64
  %v486 = vpop.permute.xlu0 %485
  %v488 = vmul.f32 %v481, %v486
  %490 = vrot.lane.b32.xlu0 %v488, 32
  %v491 = vpop.permute.xlu0 %490
  %v493 = vadd.f32 %v483, %v491
  %v494 = vtanh.pop %v493
  %496 = vrot.lane.b32.xlu0 %v494, 64
  %v497 = vpop.permute.xlu0 %496
  %v499 = vmul.f32 %v481, %v497
  %501 = vrot.lane.b32.xlu0 %v499, 32
  %v502 = vpop.permute.xlu0 %501
  %s504 = scalar_lea.vmem [#allocation3], 16
  %505 = vst.msk [vmem:[%s504] sm:$0xff] %vm192, %v502
  %s506 = scalar_lea.vmem [#allocation2], 24
  %v507 = vld [vmem:[%s506] sm:$0xff]
  %v508 = vsel %vm192, %v502, 0
  %510 = vmatprep.subr.mxu0 0.0
  %511 = vmatpush1.msra.mxu0 %v187
  %512 = vmatprep.subr.mxu0 0.0
  %513 = vmatpush1.msra.mxu0 %v188
  %514 = vmatprep.subr.mxu0 0.0
  %515 = vmatpush1.msra.mxu0 %v189
  %516 = vmatprep.subr.mxu0 0.0
  %517 = vmatpush1.msra.mxu0 %v190
  %518 = vmatprep.subr.mxu0 0.0
  %519 = vmatpush1.msra.mxu0 0.0
  %520 = vmatprep.subr.mxu0 0.0
  %521 = vmatpush1.msra.mxu0 0.0
  %522 = vmatprep.subr.mxu0 0.0
  %523 = vmatpush1.msra.mxu0 0.0
  %524 = vmatprep.subr.mxu0 0.0
  %525 = vmatpush1.msra.mxu0 0.0
  %526 = vmatprep.subr.mxu0 0.0
  %527 = vmatpush1.msra.mxu0 0.0
  %528 = vmatprep.subr.mxu0 0.0
  %529 = vmatpush1.msra.mxu0 0.0
  %530 = vmatprep.subr.mxu0 0.0
  %531 = vmatpush1.msra.mxu0 0.0
  %532 = vmatprep.subr.mxu0 0.0
  %533 = vmatpush1.msra.mxu0 0.0
  %534 = vmatprep.subr.mxu0 0.0
  %535 = vmatpush1.msra.mxu0 0.0
  %536 = vmatprep.subr.mxu0 0.0
  %537 = vmatpush1.msra.mxu0 0.0
  %538 = vmatprep.subr.mxu0 0.0
  %539 = vmatpush1.msra.mxu0 0.0
  %540 = vmatprep.subr.mxu0 0.0
  %541 = vmatpush1.msra.mxu0 0.0
  %542 = vmatprep.subr.mxu0 0.0
  %543 = vmatpush1.msra.mxu0 0.0
  %544 = vmatprep.subr.mxu0 0.0
  %545 = vmatpush1.msra.mxu0 0.0
  %546 = vmatprep.subr.mxu0 0.0
  %547 = vmatpush1.msra.mxu0 0.0
  %548 = vmatprep.subr.mxu0 0.0
  %549 = vmatpush1.msra.mxu0 0.0
  %550 = vmatprep.subr.mxu0 0.0
  %551 = vmatpush1.msra.mxu0 0.0
  %552 = vmatprep.subr.mxu0 0.0
  %553 = vmatpush1.msra.mxu0 0.0
  %554 = vmatprep.subr.mxu0 0.0
  %555 = vmatpush1.msra.mxu0 0.0
  %556 = vmatprep.subr.mxu0 0.0
  %557 = vmatpush1.msra.mxu0 0.0
  %558 = vmatprep.subr.mxu0 0.0
  %559 = vmatpush1.msra.mxu0 0.0
  %560 = vmatprep.subr.mxu0 0.0
  %561 = vmatpush1.msra.mxu0 0.0
  %562 = vmatprep.subr.mxu0 0.0
  %563 = vmatpush1.msra.mxu0 0.0
  %564 = vmatprep.subr.mxu0 0.0
  %565 = vmatpush1.msra.mxu0 0.0
  %566 = vmatprep.subr.mxu0 0.0
  %567 = vmatpush1.msra.mxu0 0.0
  %568 = vmatprep.subr.mxu0 0.0
  %569 = vmatpush1.msra.mxu0 0.0
  %570 = vmatprep.subr.mxu0 0.0
  %571 = vmatpush1.msra.mxu0 0.0
  %572 = vmatprep.subr.mxu0 0.0
  %573 = vmatpush1.msra.mxu0 0.0
  %574 = vmatprep.mubr.f32.mxu0 0.0
  %575 = vmatmul.mubr.f32.gmra.mrb[0].mxu0 %v508
  %v576 = vpop.f32.mrb[0].mxu0
  %v577 = vadd.f32 0.0, %v576
  %v578 = vpop.f32.mrb[0].mxu0
  %579 = vdwg.mxu0
  %v580 = vadd.f32 %v507, %v577
  %v581 = vxor.u32 %v580, 2147483648
  %v582 = vmul.f32 %v581, 1.442695
  %v583 = vpow.pop %v582
  %v584 = vadd.f32 %v583, 1.0
  %v585 = vrcp.pop %v584
  %v586 = vmul.f32 1.0, %v585
  %v587 = vtanh.pop %v580
  %v588 = vmul.f32 %v586, %v493
  %590 = vrot.lane.b32.xlu0 %v587, 64
  %v591 = vpop.permute.xlu0 %590
  %v593 = vmul.f32 %v586, %v591
  %595 = vrot.lane.b32.xlu0 %v593, 32
  %v596 = vpop.permute.xlu0 %595
  %v598 = vadd.f32 %v588, %v596
  %v599 = vtanh.pop %v598
  %601 = vrot.lane.b32.xlu0 %v599, 64
  %v602 = vpop.permute.xlu0 %601
  %v604 = vmul.f32 %v586, %v602
  %606 = vrot.lane.b32.xlu0 %v604, 32
  %v607 = vpop.permute.xlu0 %606
  %s609 = scalar_lea.vmem [#allocation3], 24
  %610 = vst.msk [vmem:[%s609] sm:$0xff] %vm192, %v607
  %s611 = scalar_lea.vmem [#allocation2], 32
  %v612 = vld [vmem:[%s611] sm:$0xff]
  %v613 = vsel %vm192, %v607, 0
  %615 = vmatprep.subr.mxu0 0.0
  %616 = vmatpush1.msra.mxu0 %v187
  %617 = vmatprep.subr.mxu0 0.0
  %618 = vmatpush1.msra.mxu0 %v188
  %619 = vmatprep.subr.mxu0 0.0
  %620 = vmatpush1.msra.mxu0 %v189
  %621 = vmatprep.subr.mxu0 0.0
  %622 = vmatpush1.msra.mxu0 %v190
  %623 = vmatprep.subr.mxu0 0.0
  %624 = vmatpush1.msra.mxu0 0.0
  %625 = vmatprep.subr.mxu0 0.0
  %626 = vmatpush1.msra.mxu0 0.0
  %627 = vmatprep.subr.mxu0 0.0
  %628 = vmatpush1.msra.mxu0 0.0
  %629 = vmatprep.subr.mxu0 0.0
  %630 = vmatpush1.msra.mxu0 0.0
  %631 = vmatprep.subr.mxu0 0.0
  %632 = vmatpush1.msra.mxu0 0.0
  %633 = vmatprep.subr.mxu0 0.0
  %634 = vmatpush1.msra.mxu0 0.0
  %635 = vmatprep.subr.mxu0 0.0
  %636 = vmatpush1.msra.mxu0 0.0
  %637 = vmatprep.subr.mxu0 0.0
  %638 = vmatpush1.msra.mxu0 0.0
  %639 = vmatprep.subr.mxu0 0.0
  %640 = vmatpush1.msra.mxu0 0.0
  %641 = vmatprep.subr.mxu0 0.0
  %642 = vmatpush1.msra.mxu0 0.0
  %643 = vmatprep.subr.mxu0 0.0
  %644 = vmatpush1.msra.mxu0 0.0
  %645 = vmatprep.subr.mxu0 0.0
  %646 = vmatpush1.msra.mxu0 0.0
  %647 = vmatprep.subr.mxu0 0.0
  %648 = vmatpush1.msra.mxu0 0.0
  %649 = vmatprep.subr.mxu0 0.0
  %650 = vmatpush1.msra.mxu0 0.0
  %651 = vmatprep.subr.mxu0 0.0
  %652 = vmatpush1.msra.mxu0 0.0
  %653 = vmatprep.subr.mxu0 0.0
  %654 = vmatpush1.msra.mxu0 0.0
  %655 = vmatprep.subr.mxu0 0.0
  %656 = vmatpush1.msra.mxu0 0.0
  %657 = vmatprep.subr.mxu0 0.0
  %658 = vmatpush1.msra.mxu0 0.0
  %659 = vmatprep.subr.mxu0 0.0
  %660 = vmatpush1.msra.mxu0 0.0
  %661 = vmatprep.subr.mxu0 0.0
  %662 = vmatpush1.msra.mxu0 0.0
  %663 = vmatprep.subr.mxu0 0.0
  %664 = vmatpush1.msra.mxu0 0.0
  %665 = vmatprep.subr.mxu0 0.0
  %666 = vmatpush1.msra.mxu0 0.0
  %667 = vmatprep.subr.mxu0 0.0
  %668 = vmatpush1.msra.mxu0 0.0
  %669 = vmatprep.subr.mxu0 0.0
  %670 = vmatpush1.msra.mxu0 0.0
  %671 = vmatprep.subr.mxu0 0.0
  %672 = vmatpush1.msra.mxu0 0.0
  %673 = vmatprep.subr.mxu0 0.0
  %674 = vmatpush1.msra.mxu0 0.0
  %675 = vmatprep.subr.mxu0 0.0
  %676 = vmatpush1.msra.mxu0 0.0
  %677 = vmatprep.subr.mxu0 0.0
  %678 = vmatpush1.msra.mxu0 0.0
  %679 = vmatprep.mubr.f32.mxu0 0.0
  %680 = vmatmul.mubr.f32.gmra.mrb[0].mxu0 %v613
  %v681 = vpop.f32.mrb[0].mxu0
  %v682 = vadd.f32 0.0, %v681
  %v683 = vpop.f32.mrb[0].mxu0
  %684 = vdwg.mxu0
  %v685 = vadd.f32 %v612, %v682
  %v686 = vxor.u32 %v685, 2147483648
  %v687 = vmul.f32 %v686, 1.442695
  %v688 = vpow.pop %v687
  %v689 = vadd.f32 %v688, 1.0
  %v690 = vrcp.pop %v689
  %v691 = vmul.f32 1.0, %v690
  %v692 = vtanh.pop %v685
  %v693 = vmul.f32 %v691, %v598
  %695 = vrot.lane.b32.xlu0 %v692, 64
  %v696 = vpop.permute.xlu0 %695
  %v698 = vmul.f32 %v691, %v696
  %700 = vrot.lane.b32.xlu0 %v698, 32
  %v701 = vpop.permute.xlu0 %700
  %v703 = vadd.f32 %v693, %v701
  %v704 = vtanh.pop %v703
  %706 = vrot.lane.b32.xlu0 %v704, 64
  %v707 = vpop.permute.xlu0 %706
  %v709 = vmul.f32 %v691, %v707
  %711 = vrot.lane.b32.xlu0 %v709, 32
  %v712 = vpop.permute.xlu0 %711
  %s714 = scalar_lea.vmem [#allocation3], 32
  %715 = vst.msk [vmem:[%s714] sm:$0xff] %vm192, %v712
  %s716 = scalar_lea.vmem [#allocation2], 40
  %v717 = vld [vmem:[%s716] sm:$0xff]
  %v718 = vsel %vm192, %v712, 0
  %720 = vmatprep.subr.mxu0 0.0
  %721 = vmatpush1.msra.mxu0 %v187
  %722 = vmatprep.subr.mxu0 0.0
  %723 = vmatpush1.msra.mxu0 %v188
  %724 = vmatprep.subr.mxu0 0.0
  %725 = vmatpush1.msra.mxu0 %v189
  %726 = vmatprep.subr.mxu0 0.0
  %727 = vmatpush1.msra.mxu0 %v190
  %728 = vmatprep.subr.mxu0 0.0
  %729 = vmatpush1.msra.mxu0 0.0
  %730 = vmatprep.subr.mxu0 0.0
  %731 = vmatpush1.msra.mxu0 0.0
  %732 = vmatprep.subr.mxu0 0.0
  %733 = vmatpush1.msra.mxu0 0.0
  %734 = vmatprep.subr.mxu0 0.0
  %735 = vmatpush1.msra.mxu0 0.0
  %736 = vmatprep.subr.mxu0 0.0
  %737 = vmatpush1.msra.mxu0 0.0
  %738 = vmatprep.subr.mxu0 0.0
  %739 = vmatpush1.msra.mxu0 0.0
  %740 = vmatprep.subr.mxu0 0.0
  %741 = vmatpush1.msra.mxu0 0.0
  %742 = vmatprep.subr.mxu0 0.0
  %743 = vmatpush1.msra.mxu0 0.0
  %744 = vmatprep.subr.mxu0 0.0
  %745 = vmatpush1.msra.mxu0 0.0
  %746 = vmatprep.subr.mxu0 0.0
  %747 = vmatpush1.msra.mxu0 0.0
  %748 = vmatprep.subr.mxu0 0.0
  %749 = vmatpush1.msra.mxu0 0.0
  %750 = vmatprep.subr.mxu0 0.0
  %751 = vmatpush1.msra.mxu0 0.0
  %752 = vmatprep.subr.mxu0 0.0
  %753 = vmatpush1.msra.mxu0 0.0
  %754 = vmatprep.subr.mxu0 0.0
  %755 = vmatpush1.msra.mxu0 0.0
  %756 = vmatprep.subr.mxu0 0.0
  %757 = vmatpush1.msra.mxu0 0.0
  %758 = vmatprep.subr.mxu0 0.0
  %759 = vmatpush1.msra.mxu0 0.0
  %760 = vmatprep.subr.mxu0 0.0
  %761 = vmatpush1.msra.mxu0 0.0
  %762 = vmatprep.subr.mxu0 0.0
  %763 = vmatpush1.msra.mxu0 0.0
  %764 = vmatprep.subr.mxu0 0.0
  %765 = vmatpush1.msra.mxu0 0.0
  %766 = vmatprep.subr.mxu0 0.0
  %767 = vmatpush1.msra.mxu0 0.0
  %768 = vmatprep.subr.mxu0 0.0
  %769 = vmatpush1.msra.mxu0 0.0
  %770 = vmatprep.subr.mxu0 0.0
  %771 = vmatpush1.msra.mxu0 0.0
  %772 = vmatprep.subr.mxu0 0.0
  %773 = vmatpush1.msra.mxu0 0.0
  %774 = vmatprep.subr.mxu0 0.0
  %775 = vmatpush1.msra.mxu0 0.0
  %776 = vmatprep.subr.mxu0 0.0
  %777 = vmatpush1.msra.mxu0 0.0
  %778 = vmatprep.subr.mxu0 0.0
  %779 = vmatpush1.msra.mxu0 0.0
  %780 = vmatprep.subr.mxu0 0.0
  %781 = vmatpush1.msra.mxu0 0.0
  %782 = vmatprep.subr.mxu0 0.0
  %783 = vmatpush1.msra.mxu0 0.0
  %784 = vmatprep.mubr.f32.mxu0 0.0
  %785 = vmatmul.mubr.f32.gmra.mrb[0].mxu0 %v718
  %v786 = vpop.f32.mrb[0].mxu0
  %v787 = vadd.f32 0.0, %v786
  %v788 = vpop.f32.mrb[0].mxu0
  %789 = vdwg.mxu0
  %v790 = vadd.f32 %v717, %v787
  %v791 = vxor.u32 %v790, 2147483648
  %v792 = vmul.f32 %v791, 1.442695
  %v793 = vpow.pop %v792
  %v794 = vadd.f32 %v793, 1.0
  %v795 = vrcp.pop %v794
  %v796 = vmul.f32 1.0, %v795
  %v797 = vtanh.pop %v790
  %v798 = vmul.f32 %v796, %v703
  %800 = vrot.lane.b32.xlu0 %v797, 64
  %v801 = vpop.permute.xlu0 %800
  %v803 = vmul.f32 %v796, %v801
  %805 = vrot.lane.b32.xlu0 %v803, 32
  %v806 = vpop.permute.xlu0 %805
  %v808 = vadd.f32 %v798, %v806
  %v809 = vtanh.pop %v808
  %811 = vrot.lane.b32.xlu0 %v809, 64
  %v812 = vpop.permute.xlu0 %811
  %v814 = vmul.f32 %v796, %v812
  %816 = vrot.lane.b32.xlu0 %v814, 32
  %v817 = vpop.permute.xlu0 %816
  %s819 = scalar_lea.vmem [#allocation3], 40
  %820 = vst.msk [vmem:[%s819] sm:$0xff] %vm192, %v817
  %s821 = scalar_lea.vmem [#allocation2], 48
  %v822 = vld [vmem:[%s821] sm:$0xff]
  %v823 = vsel %vm192, %v817, 0
  %825 = vmatprep.subr.mxu0 0.0
  %826 = vmatpush1.msra.mxu0 %v187
  %827 = vmatprep.subr.mxu0 0.0
  %828 = vmatpush1.msra.mxu0 %v188
  %829 = vmatprep.subr.mxu0 0.0
  %830 = vmatpush1.msra.mxu0 %v189
  %831 = vmatprep.subr.mxu0 0.0
  %832 = vmatpush1.msra.mxu0 %v190
  %833 = vmatprep.subr.mxu0 0.0
  %834 = vmatpush1.msra.mxu0 0.0
  %835 = vmatprep.subr.mxu0 0.0
  %836 = vmatpush1.msra.mxu0 0.0
  %837 = vmatprep.subr.mxu0 0.0
  %838 = vmatpush1.msra.mxu0 0.0
  %839 = vmatprep.subr.mxu0 0.0
  %840 = vmatpush1.msra.mxu0 0.0
  %841 = vmatprep.subr.mxu0 0.0
  %842 = vmatpush1.msra.mxu0 0.0
  %843 = vmatprep.subr.mxu0 0.0
  %844 = vmatpush1.msra.mxu0 0.0
  %845 = vmatprep.subr.mxu0 0.0
  %846 = vmatpush1.msra.mxu0 0.0
  %847 = vmatprep.subr.mxu0 0.0
  %848 = vmatpush1.msra.mxu0 0.0
  %849 = vmatprep.subr.mxu0 0.0
  %850 = vmatpush1.msra.mxu0 0.0
  %851 = vmatprep.subr.mxu0 0.0
  %852 = vmatpush1.msra.mxu0 0.0
  %853 = vmatprep.subr.mxu0 0.0
  %854 = vmatpush1.msra.mxu0 0.0
  %855 = vmatprep.subr.mxu0 0.0
  %856 = vmatpush1.msra.mxu0 0.0
  %857 = vmatprep.subr.mxu0 0.0
  %858 = vmatpush1.msra.mxu0 0.0
  %859 = vmatprep.subr.mxu0 0.0
  %860 = vmatpush1.msra.mxu0 0.0
  %861 = vmatprep.subr.mxu0 0.0
  %862 = vmatpush1.msra.mxu0 0.0
  %863 = vmatprep.subr.mxu0 0.0
  %864 = vmatpush1.msra.mxu0 0.0
  %865 = vmatprep.subr.mxu0 0.0
  %866 = vmatpush1.msra.mxu0 0.0
  %867 = vmatprep.subr.mxu0 0.0
  %868 = vmatpush1.msra.mxu0 0.0
  %869 = vmatprep.subr.mxu0 0.0
  %870 = vmatpush1.msra.mxu0 0.0
  %871 = vmatprep.subr.mxu0 0.0
  %872 = vmatpush1.msra.mxu0 0.0
  %873 = vmatprep.subr.mxu0 0.0
  %874 = vmatpush1.msra.mxu0 0.0
  %875 = vmatprep.subr.mxu0 0.0
  %876 = vmatpush1.msra.mxu0 0.0
  %877 = vmatprep.subr.mxu0 0.0
  %878 = vmatpush1.msra.mxu0 0.0
  %879 = vmatprep.subr.mxu0 0.0
  %880 = vmatpush1.msra.mxu0 0.0
  %881 = vmatprep.subr.mxu0 0.0
  %882 = vmatpush1.msra.mxu0 0.0
  %883 = vmatprep.subr.mxu0 0.0
  %884 = vmatpush1.msra.mxu0 0.0
  %885 = vmatprep.subr.mxu0 0.0
  %886 = vmatpush1.msra.mxu0 0.0
  %887 = vmatprep.subr.mxu0 0.0
  %888 = vmatpush1.msra.mxu0 0.0
  %889 = vmatprep.mubr.f32.mxu0 0.0
  %890 = vmatmul.mubr.f32.gmra.mrb[0].mxu0 %v823
  %v891 = vpop.f32.mrb[0].mxu0
  %v892 = vadd.f32 0.0, %v891
  %v893 = vpop.f32.mrb[0].mxu0
  %894 = vdwg.mxu0
  %v895 = vadd.f32 %v822, %v892
  %v896 = vxor.u32 %v895, 2147483648
  %v897 = vmul.f32 %v896, 1.442695
  %v898 = vpow.pop %v897
  %v899 = vadd.f32 %v898, 1.0
  %v900 = vrcp.pop %v899
  %v901 = vmul.f32 1.0, %v900
  %v902 = vtanh.pop %v895
  %v903 = vmul.f32 %v901, %v808
  %905 = vrot.lane.b32.xlu0 %v902, 64
  %v906 = vpop.permute.xlu0 %905
  %v908 = vmul.f32 %v901, %v906
  %910 = vrot.lane.b32.xlu0 %v908, 32
  %v911 = vpop.permute.xlu0 %910
  %v913 = vadd.f32 %v903, %v911
  %v914 = vtanh.pop %v913
  %916 = vrot.lane.b32.xlu0 %v914, 64
  %v917 = vpop.permute.xlu0 %916
  %v919 = vmul.f32 %v901, %v917
  %921 = vrot.lane.b32.xlu0 %v919, 32
  %v922 = vpop.permute.xlu0 %921
  %s924 = scalar_lea.vmem [#allocation3], 48
  %925 = vst.msk [vmem:[%s924] sm:$0xff] %vm192, %v922
  %s926 = scalar_lea.vmem [#allocation2], 56
  %v927 = vld [vmem:[%s926] sm:$0xff]
  %v928 = vsel %vm192, %v922, 0
  %930 = vmatprep.subr.mxu0 0.0
  %931 = vmatpush1.msra.mxu0 %v187
  %932 = vmatprep.subr.mxu0 0.0
  %933 = vmatpush1.msra.mxu0 %v188
  %934 = vmatprep.subr.mxu0 0.0
  %935 = vmatpush1.msra.mxu0 %v189
  %936 = vmatprep.subr.mxu0 0.0
  %937 = vmatpush1.msra.mxu0 %v190
  %938 = vmatprep.subr.mxu0 0.0
  %939 = vmatpush1.msra.mxu0 0.0
  %940 = vmatprep.subr.mxu0 0.0
  %941 = vmatpush1.msra.mxu0 0.0
  %942 = vmatprep.subr.mxu0 0.0
  %943 = vmatpush1.msra.mxu0 0.0
  %944 = vmatprep.subr.mxu0 0.0
  %945 = vmatpush1.msra.mxu0 0.0
  %946 = vmatprep.subr.mxu0 0.0
  %947 = vmatpush1.msra.mxu0 0.0
  %948 = vmatprep.subr.mxu0 0.0
  %949 = vmatpush1.msra.mxu0 0.0
  %950 = vmatprep.subr.mxu0 0.0
  %951 = vmatpush1.msra.mxu0 0.0
  %952 = vmatprep.subr.mxu0 0.0
  %953 = vmatpush1.msra.mxu0 0.0
  %954 = vmatprep.subr.mxu0 0.0
  %955 = vmatpush1.msra.mxu0 0.0
  %956 = vmatprep.subr.mxu0 0.0
  %957 = vmatpush1.msra.mxu0 0.0
  %958 = vmatprep.subr.mxu0 0.0
  %959 = vmatpush1.msra.mxu0 0.0
  %960 = vmatprep.subr.mxu0 0.0
  %961 = vmatpush1.msra.mxu0 0.0
  %962 = vmatprep.subr.mxu0 0.0
  %963 = vmatpush1.msra.mxu0 0.0
  %964 = vmatprep.subr.mxu0 0.0
  %965 = vmatpush1.msra.mxu0 0.0
  %966 = vmatprep.subr.mxu0 0.0
  %967 = vmatpush1.msra.mxu0 0.0
  %968 = vmatprep.subr.mxu0 0.0
  %969 = vmatpush1.msra.mxu0 0.0
  %970 = vmatprep.subr.mxu0 0.0
  %971 = vmatpush1.msra.mxu0 0.0
  %972 = vmatprep.subr.mxu0 0.0
  %973 = vmatpush1.msra.mxu0 0.0
  %974 = vmatprep.subr.mxu0 0.0
  %975 = vmatpush1.msra.mxu0 0.0
  %976 = vmatprep.subr.mxu0 0.0
  %977 = vmatpush1.msra.mxu0 0.0
  %978 = vmatprep.subr.mxu0 0.0
  %979 = vmatpush1.msra.mxu0 0.0
  %980 = vmatprep.subr.mxu0 0.0
  %981 = vmatpush1.msra.mxu0 0.0
  %982 = vmatprep.subr.mxu0 0.0
  %983 = vmatpush1.msra.mxu0 0.0
  %984 = vmatprep.subr.mxu0 0.0
  %985 = vmatpush1.msra.mxu0 0.0
  %986 = vmatprep.subr.mxu0 0.0
  %987 = vmatpush1.msra.mxu0 0.0
  %988 = vmatprep.subr.mxu0 0.0
  %989 = vmatpush1.msra.mxu0 0.0
  %990 = vmatprep.subr.mxu0 0.0
  %991 = vmatpush1.msra.mxu0 0.0
  %992 = vmatprep.subr.mxu0 0.0
  %993 = vmatpush1.msra.mxu0 0.0
  %994 = vmatprep.mubr.f32.mxu0 0.0
  %995 = vmatmul.mubr.f32.gmra.mrb[0].mxu0 %v928
  %v996 = vpop.f32.mrb[0].mxu0
  %v997 = vadd.f32 0.0, %v996
  %v998 = vpop.f32.mrb[0].mxu0
  %999 = vdwg.mxu0
  %v1000 = vadd.f32 %v927, %v997
  %v1001 = vxor.u32 %v1000, 2147483648
  %v1002 = vmul.f32 %v1001, 1.442695
  %v1003 = vpow.pop %v1002
  %v1004 = vadd.f32 %v1003, 1.0
  %v1005 = vrcp.pop %v1004
  %v1006 = vmul.f32 1.0, %v1005
  %v1007 = vtanh.pop %v1000
  %v1008 = vmul.f32 %v1006, %v913
  %1010 = vrot.lane.b32.xlu0 %v1007, 64
  %v1011 = vpop.permute.xlu0 %1010
  %v1013 = vmul.f32 %v1006, %v1011
  %1015 = vrot.lane.b32.xlu0 %v1013, 32
  %v1016 = vpop.permute.xlu0 %1015
  %v1018 = vadd.f32 %v1008, %v1016
  %v1019 = vtanh.pop %v1018
  %1021 = vrot.lane.b32.xlu0 %v1019, 64
  %v1022 = vpop.permute.xlu0 %1021
  %v1024 = vmul.f32 %v1006, %v1022
  %1026 = vrot.lane.b32.xlu0 %v1024, 32
  %v1027 = vpop.permute.xlu0 %1026
  %s1029 = scalar_lea.vmem [#allocation3], 56
  %1030 = vst.msk [vmem:[%s1029] sm:$0xff] %vm192, %v1027
  %v1031 = vld [vmem:[#allocation3] sm:$0xff]
  %v1032 = vld [vmem:[#allocation3 + $0x8] sm:$0xff]
  %v1033 = vld [vmem:[#allocation3 + $0x10] sm:$0xff]
  %v1034 = vld [vmem:[#allocation3 + $0x18] sm:$0xff]
  %v1035 = vld [vmem:[#allocation3 + $0x20] sm:$0xff]
  %v1036 = vld [vmem:[#allocation3 + $0x28] sm:$0xff]
  %v1037 = vld [vmem:[#allocation3 + $0x30] sm:$0xff]
  %v1038 = vld [vmem:[#allocation3 + $0x38] sm:$0xff]
  %v1039 = vld [vmem:[%s4] sm:$0xff]
  %v1040 = vld [vmem:[%s4 + $0x8] sm:$0xff]
  %v1041 = vld [vmem:[%s4 + $0x10] sm:$0xff]
  %v1042 = vld [vmem:[%s4 + $0x18] sm:$0xff]
  %v1043 = vld [vmem:[%s6] sm:$0x1]
  %v1045 = vlaneseq
  %v1046 = vshrl.u32 %v1045, 7
  %v1047 = vsub.s32 0, %v1046
  %v1048 = vrot.slane %v1043, %v1047
  %v1051 = vsel %vm192, %v1031, 0
  %v1054 = vsel %vm192, %v1032, 0
  %v1057 = vsel %vm192, %v1033, 0
  %v1060 = vsel %vm192, %v1034, 0
  %v1063 = vsel %vm192, %v1035, 0
  %v1066 = vsel %vm192, %v1036, 0
  %v1069 = vsel %vm192, %v1037, 0
  %v1072 = vsel %vm192, %v1038, 0
  %1074 = vmatprep.subr.mxu0 0.0
  %1075 = vmatpush1.msra.mxu0 %v1039
  %1076 = vmatprep.subr.mxu0 0.0
  %1077 = vmatpush1.msra.mxu0 %v1040
  %1078 = vmatprep.subr.mxu0 0.0
  %1079 = vmatpush1.msra.mxu0 %v1041
  %1080 = vmatprep.subr.mxu0 0.0
  %1081 = vmatpush1.msra.mxu0 %v1042
  %1082 = vmatprep.subr.mxu0 0.0
  %1083 = vmatpush1.msra.mxu0 0.0
  %1084 = vmatprep.subr.mxu0 0.0
  %1085 = vmatpush1.msra.mxu0 0.0
  %1086 = vmatprep.subr.mxu0 0.0
  %1087 = vmatpush1.msra.mxu0 0.0
  %1088 = vmatprep.subr.mxu0 0.0
  %1089 = vmatpush1.msra.mxu0 0.0
  %1090 = vmatprep.subr.mxu0 0.0
  %1091 = vmatpush1.msra.mxu0 0.0
  %1092 = vmatprep.subr.mxu0 0.0
  %1093 = vmatpush1.msra.mxu0 0.0
  %1094 = vmatprep.subr.mxu0 0.0
  %1095 = vmatpush1.msra.mxu0 0.0
  %1096 = vmatprep.subr.mxu0 0.0
  %1097 = vmatpush1.msra.mxu0 0.0
  %1098 = vmatprep.subr.mxu0 0.0
  %1099 = vmatpush1.msra.mxu0 0.0
  %1100 = vmatprep.subr.mxu0 0.0
  %1101 = vmatpush1.msra.mxu0 0.0
  %1102 = vmatprep.subr.mxu0 0.0
  %1103 = vmatpush1.msra.mxu0 0.0
  %1104 = vmatprep.subr.mxu0 0.0
  %1105 = vmatpush1.msra.mxu0 0.0
  %1106 = vmatprep.subr.mxu0 0.0
  %1107 = vmatpush1.msra.mxu0 0.0
  %1108 = vmatprep.subr.mxu0 0.0
  %1109 = vmatpush1.msra.mxu0 0.0
  %1110 = vmatprep.subr.mxu0 0.0
  %1111 = vmatpush1.msra.mxu0 0.0
  %1112 = vmatprep.subr.mxu0 0.0
  %1113 = vmatpush1.msra.mxu0 0.0
  %1114 = vmatprep.subr.mxu0 0.0
  %1115 = vmatpush1.msra.mxu0 0.0
  %1116 = vmatprep.subr.mxu0 0.0
  %1117 = vmatpush1.msra.mxu0 0.0
  %1118 = vmatprep.subr.mxu0 0.0
  %1119 = vmatpush1.msra.mxu0 0.0
  %1120 = vmatprep.subr.mxu0 0.0
  %1121 = vmatpush1.msra.mxu0 0.0
  %1122 = vmatprep.subr.mxu0 0.0
  %1123 = vmatpush1.msra.mxu0 0.0
  %1124 = vmatprep.subr.mxu0 0.0
  %1125 = vmatpush1.msra.mxu0 0.0
  %1126 = vmatprep.subr.mxu0 0.0
  %1127 = vmatpush1.msra.mxu0 0.0
  %1128 = vmatprep.subr.mxu0 0.0
  %1129 = vmatpush1.msra.mxu0 0.0
  %1130 = vmatprep.subr.mxu0 0.0
  %1131 = vmatpush1.msra.mxu0 0.0
  %1132 = vmatprep.subr.mxu0 0.0
  %1133 = vmatpush1.msra.mxu0 0.0
  %1134 = vmatprep.subr.mxu0 0.0
  %1135 = vmatpush1.msra.mxu0 0.0
  %1136 = vmatprep.subr.mxu0 0.0
  %1137 = vmatpush1.msra.mxu0 0.0
  %1138 = vmatprep.mubr.f32.mxu0 0.0
  %1139 = vmatmul.mubr.f32.gmra.mrb[0].mxu0 %v1051
  %v1140 = vpop.f32.mrb[0].mxu0
  %v1141 = vadd.f32 %v1048, %v1140
  %v1142 = vpop.f32.mrb[0].mxu0
  %1143 = vmatprep.mubr.f32.mxu0 0.0
  %1144 = vmatmul.mubr.f32.gmra.mrb[0].mxu0 %v1054
  %v1145 = vpop.f32.mrb[0].mxu0
  %v1146 = vadd.f32 %v1048, %v1145
  %v1147 = vpop.f32.mrb[0].mxu0
  %1148 = vmatprep.mubr.f32.mxu0 0.0
  %1149 = vmatmul.mubr.f32.gmra.mrb[0].mxu0 %v1057
  %v1150 = vpop.f32.mrb[0].mxu0
  %v1151 = vadd.f32 %v1048, %v1150
  %v1152 = vpop.f32.mrb[0].mxu0
  %1153 = vmatprep.mubr.f32.mxu0 0.0
  %1154 = vmatmul.mubr.f32.gmra.mrb[0].mxu0 %v1060
  %v1155 = vpop.f32.mrb[0].mxu0
  %v1156 = vadd.f32 %v1048, %v1155
  %v1157 = vpop.f32.mrb[0].mxu0
  %1158 = vmatprep.mubr.f32.mxu0 0.0
  %1159 = vmatmul.mubr.f32.gmra.mrb[0].mxu0 %v1063
  %v1160 = vpop.f32.mrb[0].mxu0
  %v1161 = vadd.f32 %v1048, %v1160
  %v1162 = vpop.f32.mrb[0].mxu0
  %1163 = vmatprep.mubr.f32.mxu0 0.0
  %1164 = vmatmul.mubr.f32.gmra.mrb[0].mxu0 %v1066
  %v1165 = vpop.f32.mrb[0].mxu0
  %v1166 = vadd.f32 %v1048, %v1165
  %v1167 = vpop.f32.mrb[0].mxu0
  %1168 = vmatprep.mubr.f32.mxu0 0.0
  %1169 = vmatmul.mubr.f32.gmra.mrb[0].mxu0 %v1069
  %v1170 = vpop.f32.mrb[0].mxu0
  %v1171 = vadd.f32 %v1048, %v1170
  %v1172 = vpop.f32.mrb[0].mxu0
  %1173 = vmatprep.mubr.f32.mxu0 0.0
  %1174 = vmatmul.mubr.f32.gmra.mrb[0].mxu0 %v1072
  %v1175 = vpop.f32.mrb[0].mxu0
  %v1176 = vadd.f32 %v1048, %v1175
  %v1177 = vpop.f32.mrb[0].mxu0
  %1178 = vdwg.mxu0
  %1179 = vst [vmem:[#allocation2] sm:$0xff] %v1141
  %1180 = vst [vmem:[#allocation2 + $0x8] sm:$0xff] %v1146
  %1181 = vst [vmem:[#allocation2 + $0x10] sm:$0xff] %v1151
  %1182 = vst [vmem:[#allocation2 + $0x18] sm:$0xff] %v1156
  %1183 = vst [vmem:[#allocation2 + $0x20] sm:$0xff] %v1161
  %1184 = vst [vmem:[#allocation2 + $0x28] sm:$0xff] %v1166
  %1185 = vst [vmem:[#allocation2 + $0x30] sm:$0xff] %v1171
  %1186 = vst [vmem:[#allocation2 + $0x38] sm:$0xff] %v1176
  %v1187 = vld [vmem:[%s5] sm:$0xff]
  %v1188 = vld [vmem:[%s5 + $0x8] sm:$0xff]
  %v1189 = vld [vmem:[%s5 + $0x10] sm:$0xff]
  %v1190 = vld [vmem:[%s5 + $0x18] sm:$0xff]
  %v1191 = vld [vmem:[#allocation2] sm:$0xff]
  %1192 = vmatprep.subr.mxu0 0.0
  %1193 = vmatpush1.msra.mxu0 %v1187
  %1194 = vmatprep.subr.mxu0 0.0
  %1195 = vmatpush1.msra.mxu0 %v1188
  %1196 = vmatprep.subr.mxu0 0.0
  %1197 = vmatpush1.msra.mxu0 %v1189
  %1198 = vmatprep.subr.mxu0 0.0
  %1199 = vmatpush1.msra.mxu0 %v1190
  %1200 = vmatprep.subr.mxu0 0.0
  %1201 = vmatpush1.msra.mxu0 0.0
  %1202 = vmatprep.subr.mxu0 0.0
  %1203 = vmatpush1.msra.mxu0 0.0
  %1204 = vmatprep.subr.mxu0 0.0
  %1205 = vmatpush1.msra.mxu0 0.0
  %1206 = vmatprep.subr.mxu0 0.0
  %1207 = vmatpush1.msra.mxu0 0.0
  %1208 = vmatprep.subr.mxu0 0.0
  %1209 = vmatpush1.msra.mxu0 0.0
  %1210 = vmatprep.subr.mxu0 0.0
  %1211 = vmatpush1.msra.mxu0 0.0
  %1212 = vmatprep.subr.mxu0 0.0
  %1213 = vmatpush1.msra.mxu0 0.0
  %1214 = vmatprep.subr.mxu0 0.0
  %1215 = vmatpush1.msra.mxu0 0.0
  %1216 = vmatprep.subr.mxu0 0.0
  %1217 = vmatpush1.msra.mxu0 0.0
  %1218 = vmatprep.subr.mxu0 0.0
  %1219 = vmatpush1.msra.mxu0 0.0
  %1220 = vmatprep.subr.mxu0 0.0
  %1221 = vmatpush1.msra.mxu0 0.0
  %1222 = vmatprep.subr.mxu0 0.0
  %1223 = vmatpush1.msra.mxu0 0.0
  %1224 = vmatprep.subr.mxu0 0.0
  %1225 = vmatpush1.msra.mxu0 0.0
  %1226 = vmatprep.subr.mxu0 0.0
  %1227 = vmatpush1.msra.mxu0 0.0
  %1228 = vmatprep.subr.mxu0 0.0
  %1229 = vmatpush1.msra.mxu0 0.0
  %1230 = vmatprep.subr.mxu0 0.0
  %1231 = vmatpush1.msra.mxu0 0.0
  %1232 = vmatprep.subr.mxu0 0.0
  %1233 = vmatpush1.msra.mxu0 0.0
  %1234 = vmatprep.subr.mxu0 0.0
  %1235 = vmatpush1.msra.mxu0 0.0
  %1236 = vmatprep.subr.mxu0 0.0
  %1237 = vmatpush1.msra.mxu0 0.0
  %1238 = vmatprep.subr.mxu0 0.0
  %1239 = vmatpush1.msra.mxu0 0.0
  %1240 = vmatprep.subr.mxu0 0.0
  %1241 = vmatpush1.msra.mxu0 0.0
  %1242 = vmatprep.subr.mxu0 0.0
  %1243 = vmatpush1.msra.mxu0 0.0
  %1244 = vmatprep.subr.mxu0 0.0
  %1245 = vmatpush1.msra.mxu0 0.0
  %1246 = vmatprep.subr.mxu0 0.0
  %1247 = vmatpush1.msra.mxu0 0.0
  %1248 = vmatprep.subr.mxu0 0.0
  %1249 = vmatpush1.msra.mxu0 0.0
  %1250 = vmatprep.subr.mxu0 0.0
  %1251 = vmatpush1.msra.mxu0 0.0
  %1252 = vmatprep.subr.mxu0 0.0
  %1253 = vmatpush1.msra.mxu0 0.0
  %1254 = vmatprep.subr.mxu0 0.0
  %1255 = vmatpush1.msra.mxu0 0.0
  %1256 = vmatprep.mubr.f32.mxu0 0.0
  %1257 = vmatmul.mubr.f32.gmra.mrb[0].mxu0 %v194
  %v1258 = vpop.f32.mrb[0].mxu0
  %v1259 = vadd.f32 0.0, %v1258
  %v1260 = vpop.f32.mrb[0].mxu0
  %1261 = vdwg.mxu0
  %v1262 = vadd.f32 %v1191, %v1259
  %v1263 = vxor.u32 %v1262, 2147483648
  %v1264 = vmul.f32 %v1263, 1.442695
  %v1265 = vpow.pop %v1264
  %v1266 = vadd.f32 %v1265, 1.0
  %v1267 = vrcp.pop %v1266
  %v1268 = vmul.f32 1.0, %v1267
  %v1269 = vtanh.pop %v1262
  %v1270 = vmul.f32 %v1268, 0.0
  %1272 = vrot.lane.b32.xlu0 %v1269, 64
  %v1273 = vpop.permute.xlu0 %1272
  %v1275 = vmul.f32 %v1268, %v1273
  %1277 = vrot.lane.b32.xlu0 %v1275, 32
  %v1278 = vpop.permute.xlu0 %1277
  %v1280 = vadd.f32 %v1270, %v1278
  %v1281 = vtanh.pop %v1280
  %1283 = vrot.lane.b32.xlu0 %v1281, 64
  %v1284 = vpop.permute.xlu0 %1283
  %v1286 = vmul.f32 %v1268, %v1284
  %1288 = vrot.lane.b32.xlu0 %v1286, 32
  %v1289 = vpop.permute.xlu0 %1288
  %1291 = vst.msk [vmem:[#allocation3] sm:$0xff] %vm192, %v1289
  %v1292 = vld [vmem:[%s296] sm:$0xff]
  %v1293 = vsel %vm192, %v1289, 0
  %1295 = vmatprep.subr.mxu0 0.0
  %1296 = vmatpush1.msra.mxu0 %v1187
  %1297 = vmatprep.subr.mxu0 0.0
  %1298 = vmatpush1.msra.mxu0 %v1188
  %1299 = vmatprep.subr.mxu0 0.0
  %1300 = vmatpush1.msra.mxu0 %v1189
  %1301 = vmatprep.subr.mxu0 0.0
  %1302 = vmatpush1.msra.mxu0 %v1190
  %1303 = vmatprep.subr.mxu0 0.0
  %1304 = vmatpush1.msra.mxu0 0.0
  %1305 = vmatprep.subr.mxu0 0.0
  %1306 = vmatpush1.msra.mxu0 0.0
  %1307 = vmatprep.subr.mxu0 0.0
  %1308 = vmatpush1.msra.mxu0 0.0
  %1309 = vmatprep.subr.mxu0 0.0
  %1310 = vmatpush1.msra.mxu0 0.0
  %1311 = vmatprep.subr.mxu0 0.0
  %1312 = vmatpush1.msra.mxu0 0.0
  %1313 = vmatprep.subr.mxu0 0.0
  %1314 = vmatpush1.msra.mxu0 0.0
  %1315 = vmatprep.subr.mxu0 0.0
  %1316 = vmatpush1.msra.mxu0 0.0
  %1317 = vmatprep.subr.mxu0 0.0
  %1318 = vmatpush1.msra.mxu0 0.0
  %1319 = vmatprep.subr.mxu0 0.0
  %1320 = vmatpush1.msra.mxu0 0.0
  %1321 = vmatprep.subr.mxu0 0.0
  %1322 = vmatpush1.msra.mxu0 0.0
  %1323 = vmatprep.subr.mxu0 0.0
  %1324 = vmatpush1.msra.mxu0 0.0
  %1325 = vmatprep.subr.mxu0 0.0
  %1326 = vmatpush1.msra.mxu0 0.0
  %1327 = vmatprep.subr.mxu0 0.0
  %1328 = vmatpush1.msra.mxu0 0.0
  %1329 = vmatprep.subr.mxu0 0.0
  %1330 = vmatpush1.msra.mxu0 0.0
  %1331 = vmatprep.subr.mxu0 0.0
  %1332 = vmatpush1.msra.mxu0 0.0
  %1333 = vmatprep.subr.mxu0 0.0
  %1334 = vmatpush1.msra.mxu0 0.0
  %1335 = vmatprep.subr.mxu0 0.0
  %1336 = vmatpush1.msra.mxu0 0.0
  %1337 = vmatprep.subr.mxu0 0.0
  %1338 = vmatpush1.msra.mxu0 0.0
  %1339 = vmatprep.subr.mxu0 0.0
  %1340 = vmatpush1.msra.mxu0 0.0
  %1341 = vmatprep.subr.mxu0 0.0
  %1342 = vmatpush1.msra.mxu0 0.0
  %1343 = vmatprep.subr.mxu0 0.0
  %1344 = vmatpush1.msra.mxu0 0.0
  %1345 = vmatprep.subr.mxu0 0.0
  %1346 = vmatpush1.msra.mxu0 0.0
  %1347 = vmatprep.subr.mxu0 0.0
  %1348 = vmatpush1.msra.mxu0 0.0
  %1349 = vmatprep.subr.mxu0 0.0
  %1350 = vmatpush1.msra.mxu0 0.0
  %1351 = vmatprep.subr.mxu0 0.0
  %1352 = vmatpush1.msra.mxu0 0.0
  %1353 = vmatprep.subr.mxu0 0.0
  %1354 = vmatpush1.msra.mxu0 0.0
  %1355 = vmatprep.subr.mxu0 0.0
  %1356 = vmatpush1.msra.mxu0 0.0
  %1357 = vmatprep.subr.mxu0 0.0
  %1358 = vmatpush1.msra.mxu0 0.0
  %1359 = vmatprep.mubr.f32.mxu0 0.0
  %1360 = vmatmul.mubr.f32.gmra.mrb[0].mxu0 %v1293
  %v1361 = vpop.f32.mrb[0].mxu0
  %v1362 = vadd.f32 0.0, %v1361
  %v1363 = vpop.f32.mrb[0].mxu0
  %1364 = vdwg.mxu0
  %v1365 = vadd.f32 %v1292, %v1362
  %v1366 = vxor.u32 %v1365, 2147483648
  %v1367 = vmul.f32 %v1366, 1.442695
  %v1368 = vpow.pop %v1367
  %v1369 = vadd.f32 %v1368, 1.0
  %v1370 = vrcp.pop %v1369
  %v1371 = vmul.f32 1.0, %v1370
  %v1372 = vtanh.pop %v1365
  %v1373 = vmul.f32 %v1371, %v1280
  %1375 = vrot.lane.b32.xlu0 %v1372, 64
  %v1376 = vpop.permute.xlu0 %1375
  %v1378 = vmul.f32 %v1371, %v1376
  %1380 = vrot.lane.b32.xlu0 %v1378, 32
  %v1381 = vpop.permute.xlu0 %1380
  %v1383 = vadd.f32 %v1373, %v1381
  %v1384 = vtanh.pop %v1383
  %1386 = vrot.lane.b32.xlu0 %v1384, 64
  %v1387 = vpop.permute.xlu0 %1386
  %v1389 = vmul.f32 %v1371, %v1387
  %1391 = vrot.lane.b32.xlu0 %v1389, 32
  %v1392 = vpop.permute.xlu0 %1391
  %1394 = vst.msk [vmem:[%s399] sm:$0xff] %vm192, %v1392
  %v1395 = vld [vmem:[%s401] sm:$0xff]
  %v1396 = vsel %vm192, %v1392, 0
  %1398 = vmatprep.subr.mxu0 0.0
  %1399 = vmatpush1.msra.mxu0 %v1187
  %1400 = vmatprep.subr.mxu0 0.0
  %1401 = vmatpush1.msra.mxu0 %v1188
  %1402 = vmatprep.subr.mxu0 0.0
  %1403 = vmatpush1.msra.mxu0 %v1189
  %1404 = vmatprep.subr.mxu0 0.0
  %1405 = vmatpush1.msra.mxu0 %v1190
  %1406 = vmatprep.subr.mxu0 0.0
  %1407 = vmatpush1.msra.mxu0 0.0
  %1408 = vmatprep.subr.mxu0 0.0
  %1409 = vmatpush1.msra.mxu0 0.0
  %1410 = vmatprep.subr.mxu0 0.0
  %1411 = vmatpush1.msra.mxu0 0.0
  %1412 = vmatprep.subr.mxu0 0.0
  %1413 = vmatpush1.msra.mxu0 0.0
  %1414 = vmatprep.subr.mxu0 0.0
  %1415 = vmatpush1.msra.mxu0 0.0
  %1416 = vmatprep.subr.mxu0 0.0
  %1417 = vmatpush1.msra.mxu0 0.0
  %1418 = vmatprep.subr.mxu0 0.0
  %1419 = vmatpush1.msra.mxu0 0.0
  %1420 = vmatprep.subr.mxu0 0.0
  %1421 = vmatpush1.msra.mxu0 0.0
  %1422 = vmatprep.subr.mxu0 0.0
  %1423 = vmatpush1.msra.mxu0 0.0
  %1424 = vmatprep.subr.mxu0 0.0
  %1425 = vmatpush1.msra.mxu0 0.0
  %1426 = vmatprep.subr.mxu0 0.0
  %1427 = vmatpush1.msra.mxu0 0.0
  %1428 = vmatprep.subr.mxu0 0.0
  %1429 = vmatpush1.msra.mxu0 0.0
  %1430 = vmatprep.subr.mxu0 0.0
  %1431 = vmatpush1.msra.mxu0 0.0
  %1432 = vmatprep.subr.mxu0 0.0
  %1433 = vmatpush1.msra.mxu0 0.0
  %1434 = vmatprep.subr.mxu0 0.0
  %1435 = vmatpush1.msra.mxu0 0.0
  %1436 = vmatprep.subr.mxu0 0.0
  %1437 = vmatpush1.msra.mxu0 0.0
  %1438 = vmatprep.subr.mxu0 0.0
  %1439 = vmatpush1.msra.mxu0 0.0
  %1440 = vmatprep.subr.mxu0 0.0
  %1441 = vmatpush1.msra.mxu0 0.0
  %1442 = vmatprep.subr.mxu0 0.0
  %1443 = vmatpush1.msra.mxu0 0.0
  %1444 = vmatprep.subr.mxu0 0.0
  %1445 = vmatpush1.msra.mxu0 0.0
  %1446 = vmatprep.subr.mxu0 0.0
  %1447 = vmatpush1.msra.mxu0 0.0
  %1448 = vmatprep.subr.mxu0 0.0
  %1449 = vmatpush1.msra.mxu0 0.0
  %1450 = vmatprep.subr.mxu0 0.0
  %1451 = vmatpush1.msra.mxu0 0.0
  %1452 = vmatprep.subr.mxu0 0.0
  %1453 = vmatpush1.msra.mxu0 0.0
  %1454 = vmatprep.subr.mxu0 0.0
  %1455 = vmatpush1.msra.mxu0 0.0
  %1456 = vmatprep.subr.mxu0 0.0
  %1457 = vmatpush1.msra.mxu0 0.0
  %1458 = vmatprep.subr.mxu0 0.0
  %1459 = vmatpush1.msra.mxu0 0.0
  %1460 = vmatprep.subr.mxu0 0.0
  %1461 = vmatpush1.msra.mxu0 0.0
  %1462 = vmatprep.mubr.f32.mxu0 0.0
  %1463 = vmatmul.mubr.f32.gmra.mrb[0].mxu0 %v1396
  %v1464 = vpop.f32.mrb[0].mxu0
  %v1465 = vadd.f32 0.0, %v1464
  %v1466 = vpop.f32.mrb[0].mxu0
  %1467 = vdwg.mxu0
  %v1468 = vadd.f32 %v1395, %v1465
  %v1469 = vxor.u32 %v1468, 2147483648
  %v1470 = vmul.f32 %v1469, 1.442695
  %v1471 = vpow.pop %v1470
  %v1472 = vadd.f32 %v1471, 1.0
  %v1473 = vrcp.pop %v1472
  %v1474 = vmul.f32 1.0, %v1473
  %v1475 = vtanh.pop %v1468
  %v1476 = vmul.f32 %v1474, %v1383
  %1478 = vrot.lane.b32.xlu0 %v1475, 64
  %v1479 = vpop.permute.xlu0 %1478
  %v1481 = vmul.f32 %v1474, %v1479
  %1483 = vrot.lane.b32.xlu0 %v1481, 32
  %v1484 = vpop.permute.xlu0 %1483
  %v1486 = vadd.f32 %v1476, %v1484
  %v1487 = vtanh.pop %v1486
  %1489 = vrot.lane.b32.xlu0 %v1487, 64
  %v1490 = vpop.permute.xlu0 %1489
  %v1492 = vmul.f32 %v1474, %v1490
  %1494 = vrot.lane.b32.xlu0 %v1492, 32
  %v1495 = vpop.permute.xlu0 %1494
  %1497 = vst.msk [vmem:[%s504] sm:$0xff] %vm192, %v1495
  %v1498 = vld [vmem:[%s506] sm:$0xff]
  %v1499 = vsel %vm192, %v1495, 0
  %1501 = vmatprep.subr.mxu0 0.0
  %1502 = vmatpush1.msra.mxu0 %v1187
  %1503 = vmatprep.subr.mxu0 0.0
  %1504 = vmatpush1.msra.mxu0 %v1188
  %1505 = vmatprep.subr.mxu0 0.0
  %1506 = vmatpush1.msra.mxu0 %v1189
  %1507 = vmatprep.subr.mxu0 0.0
  %1508 = vmatpush1.msra.mxu0 %v1190
  %1509 = vmatprep.subr.mxu0 0.0
  %1510 = vmatpush1.msra.mxu0 0.0
  %1511 = vmatprep.subr.mxu0 0.0
  %1512 = vmatpush1.msra.mxu0 0.0
  %1513 = vmatprep.subr.mxu0 0.0
  %1514 = vmatpush1.msra.mxu0 0.0
  %1515 = vmatprep.subr.mxu0 0.0
  %1516 = vmatpush1.msra.mxu0 0.0
  %1517 = vmatprep.subr.mxu0 0.0
  %1518 = vmatpush1.msra.mxu0 0.0
  %1519 = vmatprep.subr.mxu0 0.0
  %1520 = vmatpush1.msra.mxu0 0.0
  %1521 = vmatprep.subr.mxu0 0.0
  %1522 = vmatpush1.msra.mxu0 0.0
  %1523 = vmatprep.subr.mxu0 0.0
  %1524 = vmatpush1.msra.mxu0 0.0
  %1525 = vmatprep.subr.mxu0 0.0
  %1526 = vmatpush1.msra.mxu0 0.0
  %1527 = vmatprep.subr.mxu0 0.0
  %1528 = vmatpush1.msra.mxu0 0.0
  %1529 = vmatprep.subr.mxu0 0.0
  %1530 = vmatpush1.msra.mxu0 0.0
  %1531 = vmatprep.subr.mxu0 0.0
  %1532 = vmatpush1.msra.mxu0 0.0
  %1533 = vmatprep.subr.mxu0 0.0
  %1534 = vmatpush1.msra.mxu0 0.0
  %1535 = vmatprep.subr.mxu0 0.0
  %1536 = vmatpush1.msra.mxu0 0.0
  %1537 = vmatprep.subr.mxu0 0.0
  %1538 = vmatpush1.msra.mxu0 0.0
  %1539 = vmatprep.subr.mxu0 0.0
  %1540 = vmatpush1.msra.mxu0 0.0
  %1541 = vmatprep.subr.mxu0 0.0
  %1542 = vmatpush1.msra.mxu0 0.0
  %1543 = vmatprep.subr.mxu0 0.0
  %1544 = vmatpush1.msra.mxu0 0.0
  %1545 = vmatprep.subr.mxu0 0.0
  %1546 = vmatpush1.msra.mxu0 0.0
  %1547 = vmatprep.subr.mxu0 0.0
  %1548 = vmatpush1.msra.mxu0 0.0
  %1549 = vmatprep.subr.mxu0 0.0
  %1550 = vmatpush1.msra.mxu0 0.0
  %1551 = vmatprep.subr.mxu0 0.0
  %1552 = vmatpush1.msra.mxu0 0.0
  %1553 = vmatprep.subr.mxu0 0.0
  %1554 = vmatpush1.msra.mxu0 0.0
  %1555 = vmatprep.subr.mxu0 0.0
  %1556 = vmatpush1.msra.mxu0 0.0
  %1557 = vmatprep.subr.mxu0 0.0
  %1558 = vmatpush1.msra.mxu0 0.0
  %1559 = vmatprep.subr.mxu0 0.0
  %1560 = vmatpush1.msra.mxu0 0.0
  %1561 = vmatprep.subr.mxu0 0.0
  %1562 = vmatpush1.msra.mxu0 0.0
  %1563 = vmatprep.subr.mxu0 0.0
  %1564 = vmatpush1.msra.mxu0 0.0
  %1565 = vmatprep.mubr.f32.mxu0 0.0
  %1566 = vmatmul.mubr.f32.gmra.mrb[0].mxu0 %v1499
  %v1567 = vpop.f32.mrb[0].mxu0
  %v1568 = vadd.f32 0.0, %v1567
  %v1569 = vpop.f32.mrb[0].mxu0
  %1570 = vdwg.mxu0
  %v1571 = vadd.f32 %v1498, %v1568
  %v1572 = vxor.u32 %v1571, 2147483648
  %v1573 = vmul.f32 %v1572, 1.442695
  %v1574 = vpow.pop %v1573
  %v1575 = vadd.f32 %v1574, 1.0
  %v1576 = vrcp.pop %v1575
  %v1577 = vmul.f32 1.0, %v1576
  %v1578 = vtanh.pop %v1571
  %v1579 = vmul.f32 %v1577, %v1486
  %1581 = vrot.lane.b32.xlu0 %v1578, 64
  %v1582 = vpop.permute.xlu0 %1581
  %v1584 = vmul.f32 %v1577, %v1582
  %1586 = vrot.lane.b32.xlu0 %v1584, 32
  %v1587 = vpop.permute.xlu0 %1586
  %v1589 = vadd.f32 %v1579, %v1587
  %v1590 = vtanh.pop %v1589
  %1592 = vrot.lane.b32.xlu0 %v1590, 64
  %v1593 = vpop.permute.xlu0 %1592
  %v1595 = vmul.f32 %v1577, %v1593
  %1597 = vrot.lane.b32.xlu0 %v1595, 32
  %v1598 = vpop.permute.xlu0 %1597
  %1600 = vst.msk [vmem:[%s609] sm:$0xff] %vm192, %v1598
  %v1601 = vld [vmem:[%s611] sm:$0xff]
  %v1602 = vsel %vm192, %v1598, 0
  %1604 = vmatprep.subr.mxu0 0.0
  %1605 = vmatpush1.msra.mxu0 %v1187
  %1606 = vmatprep.subr.mxu0 0.0
  %1607 = vmatpush1.msra.mxu0 %v1188
  %1608 = vmatprep.subr.mxu0 0.0
  %1609 = vmatpush1.msra.mxu0 %v1189
  %1610 = vmatprep.subr.mxu0 0.0
  %1611 = vmatpush1.msra.mxu0 %v1190
  %1612 = vmatprep.subr.mxu0 0.0
  %1613 = vmatpush1.msra.mxu0 0.0
  %1614 = vmatprep.subr.mxu0 0.0
  %1615 = vmatpush1.msra.mxu0 0.0
  %1616 = vmatprep.subr.mxu0 0.0
  %1617 = vmatpush1.msra.mxu0 0.0
  %1618 = vmatprep.subr.mxu0 0.0
  %1619 = vmatpush1.msra.mxu0 0.0
  %1620 = vmatprep.subr.mxu0 0.0
  %1621 = vmatpush1.msra.mxu0 0.0
  %1622 = vmatprep.subr.mxu0 0.0
  %1623 = vmatpush1.msra.mxu0 0.0
  %1624 = vmatprep.subr.mxu0 0.0
  %1625 = vmatpush1.msra.mxu0 0.0
  %1626 = vmatprep.subr.mxu0 0.0
  %1627 = vmatpush1.msra.mxu0 0.0
  %1628 = vmatprep.subr.mxu0 0.0
  %1629 = vmatpush1.msra.mxu0 0.0
  %1630 = vmatprep.subr.mxu0 0.0
  %1631 = vmatpush1.msra.mxu0 0.0
  %1632 = vmatprep.subr.mxu0 0.0
  %1633 = vmatpush1.msra.mxu0 0.0
  %1634 = vmatprep.subr.mxu0 0.0
  %1635 = vmatpush1.msra.mxu0 0.0
  %1636 = vmatprep.subr.mxu0 0.0
  %1637 = vmatpush1.msra.mxu0 0.0
  %1638 = vmatprep.subr.mxu0 0.0
  %1639 = vmatpush1.msra.mxu0 0.0
  %1640 = vmatprep.subr.mxu0 0.0
  %1641 = vmatpush1.msra.mxu0 0.0
  %1642 = vmatprep.subr.mxu0 0.0
  %1643 = vmatpush1.msra.mxu0 0.0
  %1644 = vmatprep.subr.mxu0 0.0
  %1645 = vmatpush1.msra.mxu0 0.0
  %1646 = vmatprep.subr.mxu0 0.0
  %1647 = vmatpush1.msra.mxu0 0.0
  %1648 = vmatprep.subr.mxu0 0.0
  %1649 = vmatpush1.msra.mxu0 0.0
  %1650 = vmatprep.subr.mxu0 0.0
  %1651 = vmatpush1.msra.mxu0 0.0
  %1652 = vmatprep.subr.mxu0 0.0
  %1653 = vmatpush1.msra.mxu0 0.0
  %1654 = vmatprep.subr.mxu0 0.0
  %1655 = vmatpush1.msra.mxu0 0.0
  %1656 = vmatprep.subr.mxu0 0.0
  %1657 = vmatpush1.msra.mxu0 0.0
  %1658 = vmatprep.subr.mxu0 0.0
  %1659 = vmatpush1.msra.mxu0 0.0
  %1660 = vmatprep.subr.mxu0 0.0
  %1661 = vmatpush1.msra.mxu0 0.0
  %1662 = vmatprep.subr.mxu0 0.0
  %1663 = vmatpush1.msra.mxu0 0.0
  %1664 = vmatprep.subr.mxu0 0.0
  %1665 = vmatpush1.msra.mxu0 0.0
  %1666 = vmatprep.subr.mxu0 0.0
  %1667 = vmatpush1.msra.mxu0 0.0
  %1668 = vmatprep.mubr.f32.mxu0 0.0
  %1669 = vmatmul.mubr.f32.gmra.mrb[0].mxu0 %v1602
  %v1670 = vpop.f32.mrb[0].mxu0
  %v1671 = vadd.f32 0.0, %v1670
  %v1672 = vpop.f32.mrb[0].mxu0
  %1673 = vdwg.mxu0
  %v1674 = vadd.f32 %v1601, %v1671
  %v1675 = vxor.u32 %v1674, 2147483648
  %v1676 = vmul.f32 %v1675, 1.442695
  %v1677 = vpow.pop %v1676
  %v1678 = vadd.f32 %v1677, 1.0
  %v1679 = vrcp.pop %v1678
  %v1680 = vmul.f32 1.0, %v1679
  %v1681 = vtanh.pop %v1674
  %v1682 = vmul.f32 %v1680, %v1589
  %1684 = vrot.lane.b32.xlu0 %v1681, 64
  %v1685 = vpop.permute.xlu0 %1684
  %v1687 = vmul.f32 %v1680, %v1685
  %1689 = vrot.lane.b32.xlu0 %v1687, 32
  %v1690 = vpop.permute.xlu0 %1689
  %v1692 = vadd.f32 %v1682, %v1690
  %v1693 = vtanh.pop %v1692
  %1695 = vrot.lane.b32.xlu0 %v1693, 64
  %v1696 = vpop.permute.xlu0 %1695
  %v1698 = vmul.f32 %v1680, %v1696
  %1700 = vrot.lane.b32.xlu0 %v1698, 32
  %v1701 = vpop.permute.xlu0 %1700
  %1703 = vst.msk [vmem:[%s714] sm:$0xff] %vm192, %v1701
  %v1704 = vld [vmem:[%s716] sm:$0xff]
  %v1705 = vsel %vm192, %v1701, 0
  %1707 = vmatprep.subr.mxu0 0.0
  %1708 = vmatpush1.msra.mxu0 %v1187
  %1709 = vmatprep.subr.mxu0 0.0
  %1710 = vmatpush1.msra.mxu0 %v1188
  %1711 = vmatprep.subr.mxu0 0.0
  %1712 = vmatpush1.msra.mxu0 %v1189
  %1713 = vmatprep.subr.mxu0 0.0
  %1714 = vmatpush1.msra.mxu0 %v1190
  %1715 = vmatprep.subr.mxu0 0.0
  %1716 = vmatpush1.msra.mxu0 0.0
  %1717 = vmatprep.subr.mxu0 0.0
  %1718 = vmatpush1.msra.mxu0 0.0
  %1719 = vmatprep.subr.mxu0 0.0
  %1720 = vmatpush1.msra.mxu0 0.0
  %1721 = vmatprep.subr.mxu0 0.0
  %1722 = vmatpush1.msra.mxu0 0.0
  %1723 = vmatprep.subr.mxu0 0.0
  %1724 = vmatpush1.msra.mxu0 0.0
  %1725 = vmatprep.subr.mxu0 0.0
  %1726 = vmatpush1.msra.mxu0 0.0
  %1727 = vmatprep.subr.mxu0 0.0
  %1728 = vmatpush1.msra.mxu0 0.0
  %1729 = vmatprep.subr.mxu0 0.0
  %1730 = vmatpush1.msra.mxu0 0.0
  %1731 = vmatprep.subr.mxu0 0.0
  %1732 = vmatpush1.msra.mxu0 0.0
  %1733 = vmatprep.subr.mxu0 0.0
  %1734 = vmatpush1.msra.mxu0 0.0
  %1735 = vmatprep.subr.mxu0 0.0
  %1736 = vmatpush1.msra.mxu0 0.0
  %1737 = vmatprep.subr.mxu0 0.0
  %1738 = vmatpush1.msra.mxu0 0.0
  %1739 = vmatprep.subr.mxu0 0.0
  %1740 = vmatpush1.msra.mxu0 0.0
  %1741 = vmatprep.subr.mxu0 0.0
  %1742 = vmatpush1.msra.mxu0 0.0
  %1743 = vmatprep.subr.mxu0 0.0
  %1744 = vmatpush1.msra.mxu0 0.0
  %1745 = vmatprep.subr.mxu0 0.0
  %1746 = vmatpush1.msra.mxu0 0.0
  %1747 = vmatprep.subr.mxu0 0.0
  %1748 = vmatpush1.msra.mxu0 0.0
  %1749 = vmatprep.subr.mxu0 0.0
  %1750 = vmatpush1.msra.mxu0 0.0
  %1751 = vmatprep.subr.mxu0 0.0
  %1752 = vmatpush1.msra.mxu0 0.0
  %1753 = vmatprep.subr.mxu0 0.0
  %1754 = vmatpush1.msra.mxu0 0.0
  %1755 = vmatprep.subr.mxu0 0.0
  %1756 = vmatpush1.msra.mxu0 0.0
  %1757 = vmatprep.subr.mxu0 0.0
  %1758 = vmatpush1.msra.mxu0 0.0
  %1759 = vmatprep.subr.mxu0 0.0
  %1760 = vmatpush1.msra.mxu0 0.0
  %1761 = vmatprep.subr.mxu0 0.0
  %1762 = vmatpush1.msra.mxu0 0.0
  %1763 = vmatprep.subr.mxu0 0.0
  %1764 = vmatpush1.msra.mxu0 0.0
  %1765 = vmatprep.subr.mxu0 0.0
  %1766 = vmatpush1.msra.mxu0 0.0
  %1767 = vmatprep.subr.mxu0 0.0
  %1768 = vmatpush1.msra.mxu0 0.0
  %1769 = vmatprep.subr.mxu0 0.0
  %1770 = vmatpush1.msra.mxu0 0.0
  %1771 = vmatprep.mubr.f32.mxu0 0.0
  %1772 = vmatmul.mubr.f32.gmra.mrb[0].mxu0 %v1705
  %v1773 = vpop.f32.mrb[0].mxu0
  %v1774 = vadd.f32 0.0, %v1773
  %v1775 = vpop.f32.mrb[0].mxu0
  %1776 = vdwg.mxu0
  %v1777 = vadd.f32 %v1704, %v1774
  %v1778 = vxor.u32 %v1777, 2147483648
  %v1779 = vmul.f32 %v1778, 1.442695
  %v1780 = vpow.pop %v1779
  %v1781 = vadd.f32 %v1780, 1.0
  %v1782 = vrcp.pop %v1781
  %v1783 = vmul.f32 1.0, %v1782
  %v1784 = vtanh.pop %v1777
  %v1785 = vmul.f32 %v1783, %v1692
  %1787 = vrot.lane.b32.xlu0 %v1784, 64
  %v1788 = vpop.permute.xlu0 %1787
  %v1790 = vmul.f32 %v1783, %v1788
  %1792 = vrot.lane.b32.xlu0 %v1790, 32
  %v1793 = vpop.permute.xlu0 %1792
  %v1795 = vadd.f32 %v1785, %v1793
  %v1796 = vtanh.pop %v1795
  %1798 = vrot.lane.b32.xlu0 %v1796, 64
  %v1799 = vpop.permute.xlu0 %1798
  %v1801 = vmul.f32 %v1783, %v1799
  %1803 = vrot.lane.b32.xlu0 %v1801, 32
  %v1804 = vpop.permute.xlu0 %1803
  %1806 = vst.msk [vmem:[%s819] sm:$0xff] %vm192, %v1804
  %v1807 = vld [vmem:[%s821] sm:$0xff]
  %v1808 = vsel %vm192, %v1804, 0
  %1810 = vmatprep.subr.mxu0 0.0
  %1811 = vmatpush1.msra.mxu0 %v1187
  %1812 = vmatprep.subr.mxu0 0.0
  %1813 = vmatpush1.msra.mxu0 %v1188
  %1814 = vmatprep.subr.mxu0 0.0
  %1815 = vmatpush1.msra.mxu0 %v1189
  %1816 = vmatprep.subr.mxu0 0.0
  %1817 = vmatpush1.msra.mxu0 %v1190
  %1818 = vmatprep.subr.mxu0 0.0
  %1819 = vmatpush1.msra.mxu0 0.0
  %1820 = vmatprep.subr.mxu0 0.0
  %1821 = vmatpush1.msra.mxu0 0.0
  %1822 = vmatprep.subr.mxu0 0.0
  %1823 = vmatpush1.msra.mxu0 0.0
  %1824 = vmatprep.subr.mxu0 0.0
  %1825 = vmatpush1.msra.mxu0 0.0
  %1826 = vmatprep.subr.mxu0 0.0
  %1827 = vmatpush1.msra.mxu0 0.0
  %1828 = vmatprep.subr.mxu0 0.0
  %1829 = vmatpush1.msra.mxu0 0.0
  %1830 = vmatprep.subr.mxu0 0.0
  %1831 = vmatpush1.msra.mxu0 0.0
  %1832 = vmatprep.subr.mxu0 0.0
  %1833 = vmatpush1.msra.mxu0 0.0
  %1834 = vmatprep.subr.mxu0 0.0
  %1835 = vmatpush1.msra.mxu0 0.0
  %1836 = vmatprep.subr.mxu0 0.0
  %1837 = vmatpush1.msra.mxu0 0.0
  %1838 = vmatprep.subr.mxu0 0.0
  %1839 = vmatpush1.msra.mxu0 0.0
  %1840 = vmatprep.subr.mxu0 0.0
  %1841 = vmatpush1.msra.mxu0 0.0
  %1842 = vmatprep.subr.mxu0 0.0
  %1843 = vmatpush1.msra.mxu0 0.0
  %1844 = vmatprep.subr.mxu0 0.0
  %1845 = vmatpush1.msra.mxu0 0.0
  %1846 = vmatprep.subr.mxu0 0.0
  %1847 = vmatpush1.msra.mxu0 0.0
  %1848 = vmatprep.subr.mxu0 0.0
  %1849 = vmatpush1.msra.mxu0 0.0
  %1850 = vmatprep.subr.mxu0 0.0
  %1851 = vmatpush1.msra.mxu0 0.0
  %1852 = vmatprep.subr.mxu0 0.0
  %1853 = vmatpush1.msra.mxu0 0.0
  %1854 = vmatprep.subr.mxu0 0.0
  %1855 = vmatpush1.msra.mxu0 0.0
  %1856 = vmatprep.subr.mxu0 0.0
  %1857 = vmatpush1.msra.mxu0 0.0
  %1858 = vmatprep.subr.mxu0 0.0
  %1859 = vmatpush1.msra.mxu0 0.0
  %1860 = vmatprep.subr.mxu0 0.0
  %1861 = vmatpush1.msra.mxu0 0.0
  %1862 = vmatprep.subr.mxu0 0.0
  %1863 = vmatpush1.msra.mxu0 0.0
  %1864 = vmatprep.subr.mxu0 0.0
  %1865 = vmatpush1.msra.mxu0 0.0
  %1866 = vmatprep.subr.mxu0 0.0
  %1867 = vmatpush1.msra.mxu0 0.0
  %1868 = vmatprep.subr.mxu0 0.0
  %1869 = vmatpush1.msra.mxu0 0.0
  %1870 = vmatprep.subr.mxu0 0.0
  %1871 = vmatpush1.msra.mxu0 0.0
  %1872 = vmatprep.subr.mxu0 0.0
  %1873 = vmatpush1.msra.mxu0 0.0
  %1874 = vmatprep.mubr.f32.mxu0 0.0
  %1875 = vmatmul.mubr.f32.gmra.mrb[0].mxu0 %v1808
  %v1876 = vpop.f32.mrb[0].mxu0
  %v1877 = vadd.f32 0.0, %v1876
  %v1878 = vpop.f32.mrb[0].mxu0
  %1879 = vdwg.mxu0
  %v1880 = vadd.f32 %v1807, %v1877
  %v1881 = vxor.u32 %v1880, 2147483648
  %v1882 = vmul.f32 %v1881, 1.442695
  %v1883 = vpow.pop %v1882
  %v1884 = vadd.f32 %v1883, 1.0
  %v1885 = vrcp.pop %v1884
  %v1886 = vmul.f32 1.0, %v1885
  %v1887 = vtanh.pop %v1880
  %v1888 = vmul.f32 %v1886, %v1795
  %1890 = vrot.lane.b32.xlu0 %v1887, 64
  %v1891 = vpop.permute.xlu0 %1890
  %v1893 = vmul.f32 %v1886, %v1891
  %1895 = vrot.lane.b32.xlu0 %v1893, 32
  %v1896 = vpop.permute.xlu0 %1895
  %v1898 = vadd.f32 %v1888, %v1896
  %v1899 = vtanh.pop %v1898
  %1901 = vrot.lane.b32.xlu0 %v1899, 64
  %v1902 = vpop.permute.xlu0 %1901
  %v1904 = vmul.f32 %v1886, %v1902
  %1906 = vrot.lane.b32.xlu0 %v1904, 32
  %v1907 = vpop.permute.xlu0 %1906
  %1909 = vst.msk [vmem:[%s924] sm:$0xff] %vm192, %v1907
  %v1910 = vld [vmem:[%s926] sm:$0xff]
  %v1911 = vsel %vm192, %v1907, 0
  %1913 = vmatprep.subr.mxu0 0.0
  %1914 = vmatpush1.msra.mxu0 %v1187
  %1915 = vmatprep.subr.mxu0 0.0
  %1916 = vmatpush1.msra.mxu0 %v1188
  %1917 = vmatprep.subr.mxu0 0.0
  %1918 = vmatpush1.msra.mxu0 %v1189
  %1919 = vmatprep.subr.mxu0 0.0
  %1920 = vmatpush1.msra.mxu0 %v1190
  %1921 = vmatprep.subr.mxu0 0.0
  %1922 = vmatpush1.msra.mxu0 0.0
  %1923 = vmatprep.subr.mxu0 0.0
  %1924 = vmatpush1.msra.mxu0 0.0
  %1925 = vmatprep.subr.mxu0 0.0
  %1926 = vmatpush1.msra.mxu0 0.0
  %1927 = vmatprep.subr.mxu0 0.0
  %1928 = vmatpush1.msra.mxu0 0.0
  %1929 = vmatprep.subr.mxu0 0.0
  %1930 = vmatpush1.msra.mxu0 0.0
  %1931 = vmatprep.subr.mxu0 0.0
  %1932 = vmatpush1.msra.mxu0 0.0
  %1933 = vmatprep.subr.mxu0 0.0
  %1934 = vmatpush1.msra.mxu0 0.0
  %1935 = vmatprep.subr.mxu0 0.0
  %1936 = vmatpush1.msra.mxu0 0.0
  %1937 = vmatprep.subr.mxu0 0.0
  %1938 = vmatpush1.msra.mxu0 0.0
  %1939 = vmatprep.subr.mxu0 0.0
  %1940 = vmatpush1.msra.mxu0 0.0
  %1941 = vmatprep.subr.mxu0 0.0
  %1942 = vmatpush1.msra.mxu0 0.0
  %1943 = vmatprep.subr.mxu0 0.0
  %1944 = vmatpush1.msra.mxu0 0.0
  %1945 = vmatprep.subr.mxu0 0.0
  %1946 = vmatpush1.msra.mxu0 0.0
  %1947 = vmatprep.subr.mxu0 0.0
  %1948 = vmatpush1.msra.mxu0 0.0
  %1949 = vmatprep.subr.mxu0 0.0
  %1950 = vmatpush1.msra.mxu0 0.0
  %1951 = vmatprep.subr.mxu0 0.0
  %1952 = vmatpush1.msra.mxu0 0.0
  %1953 = vmatprep.subr.mxu0 0.0
  %1954 = vmatpush1.msra.mxu0 0.0
  %1955 = vmatprep.subr.mxu0 0.0
  %1956 = vmatpush1.msra.mxu0 0.0
  %1957 = vmatprep.subr.mxu0 0.0
  %1958 = vmatpush1.msra.mxu0 0.0
  %1959 = vmatprep.subr.mxu0 0.0
  %1960 = vmatpush1.msra.mxu0 0.0
  %1961 = vmatprep.subr.mxu0 0.0
  %1962 = vmatpush1.msra.mxu0 0.0
  %1963 = vmatprep.subr.mxu0 0.0
  %1964 = vmatpush1.msra.mxu0 0.0
  %1965 = vmatprep.subr.mxu0 0.0
  %1966 = vmatpush1.msra.mxu0 0.0
  %1967 = vmatprep.subr.mxu0 0.0
  %1968 = vmatpush1.msra.mxu0 0.0
  %1969 = vmatprep.subr.mxu0 0.0
  %1970 = vmatpush1.msra.mxu0 0.0
  %1971 = vmatprep.subr.mxu0 0.0
  %1972 = vmatpush1.msra.mxu0 0.0
  %1973 = vmatprep.subr.mxu0 0.0
  %1974 = vmatpush1.msra.mxu0 0.0
  %1975 = vmatprep.subr.mxu0 0.0
  %1976 = vmatpush1.msra.mxu0 0.0
  %1977 = vmatprep.mubr.f32.mxu0 0.0
  %1978 = vmatmul.mubr.f32.gmra.mrb[0].mxu0 %v1911
  %v1979 = vpop.f32.mrb[0].mxu0
  %v1980 = vadd.f32 0.0, %v1979
  %v1981 = vpop.f32.mrb[0].mxu0
  %1982 = vdwg.mxu0
  %v1983 = vadd.f32 %v1910, %v1980
  %v1984 = vxor.u32 %v1983, 2147483648
  %v1985 = vmul.f32 %v1984, 1.442695
  %v1986 = vpow.pop %v1985
  %v1987 = vadd.f32 %v1986, 1.0
  %v1988 = vrcp.pop %v1987
  %v1989 = vmul.f32 1.0, %v1988
  %v1990 = vtanh.pop %v1983
  %v1991 = vmul.f32 %v1989, %v1898
  %1993 = vrot.lane.b32.xlu0 %v1990, 64
  %v1994 = vpop.permute.xlu0 %1993
  %v1996 = vmul.f32 %v1989, %v1994
  %1998 = vrot.lane.b32.xlu0 %v1996, 32
  %v1999 = vpop.permute.xlu0 %1998
  %v2001 = vadd.f32 %v1991, %v1999
  %v2002 = vtanh.pop %v2001
  %2004 = vrot.lane.b32.xlu0 %v2002, 64
  %v2005 = vpop.permute.xlu0 %2004
  %v2007 = vmul.f32 %v1989, %v2005
  %2009 = vrot.lane.b32.xlu0 %v2007, 32
  %v2010 = vpop.permute.xlu0 %2009
  %2012 = vst.msk [vmem:[%s1029] sm:$0xff] %vm192, %v2010
  %v2013 = vld [vmem:[%s7] sm:$0xff]
  %v2014 = vld [vmem:[%s7 + $0x8] sm:$0xff]
  %v2015 = vld [vmem:[%s7 + $0x10] sm:$0xff]
  %v2016 = vld [vmem:[%s7 + $0x18] sm:$0xff]
  %v2017 = vld [vmem:[%s8] sm:$0x1]
  %v2019 = vlaneseq
  %v2020 = vshrl.u32 %v2019, 7
  %v2021 = vsub.s32 0, %v2020
  %v2022 = vrot.slane %v2017, %v2021
  %v2024 = vsel %vm192, %v2010, 0
  %2026 = vmatprep.subr.mxu0 0.0
  %2027 = vmatpush1.msra.mxu0 %v2013
  %2028 = vmatprep.subr.mxu0 0.0
  %2029 = vmatpush1.msra.mxu0 %v2014
  %2030 = vmatprep.subr.mxu0 0.0
  %2031 = vmatpush1.msra.mxu0 %v2015
  %2032 = vmatprep.subr.mxu0 0.0
  %2033 = vmatpush1.msra.mxu0 %v2016
  %2034 = vmatprep.subr.mxu0 0.0
  %2035 = vmatpush1.msra.mxu0 0.0
  %2036 = vmatprep.subr.mxu0 0.0
  %2037 = vmatpush1.msra.mxu0 0.0
  %2038 = vmatprep.subr.mxu0 0.0
  %2039 = vmatpush1.msra.mxu0 0.0
  %2040 = vmatprep.subr.mxu0 0.0
  %2041 = vmatpush1.msra.mxu0 0.0
  %2042 = vmatprep.subr.mxu0 0.0
  %2043 = vmatpush1.msra.mxu0 0.0
  %2044 = vmatprep.subr.mxu0 0.0
  %2045 = vmatpush1.msra.mxu0 0.0
  %2046 = vmatprep.subr.mxu0 0.0
  %2047 = vmatpush1.msra.mxu0 0.0
  %2048 = vmatprep.subr.mxu0 0.0
  %2049 = vmatpush1.msra.mxu0 0.0
  %2050 = vmatprep.subr.mxu0 0.0
  %2051 = vmatpush1.msra.mxu0 0.0
  %2052 = vmatprep.subr.mxu0 0.0
  %2053 = vmatpush1.msra.mxu0 0.0
  %2054 = vmatprep.subr.mxu0 0.0
  %2055 = vmatpush1.msra.mxu0 0.0
  %2056 = vmatprep.subr.mxu0 0.0
  %2057 = vmatpush1.msra.mxu0 0.0
  %2058 = vmatprep.subr.mxu0 0.0
  %2059 = vmatpush1.msra.mxu0 0.0
  %2060 = vmatprep.subr.mxu0 0.0
  %2061 = vmatpush1.msra.mxu0 0.0
  %2062 = vmatprep.subr.mxu0 0.0
  %2063 = vmatpush1.msra.mxu0 0.0
  %2064 = vmatprep.subr.mxu0 0.0
  %2065 = vmatpush1.msra.mxu0 0.0
  %2066 = vmatprep.subr.mxu0 0.0
  %2067 = vmatpush1.msra.mxu0 0.0
  %2068 = vmatprep.subr.mxu0 0.0
  %2069 = vmatpush1.msra.mxu0 0.0
  %2070 = vmatprep.subr.mxu0 0.0
  %2071 = vmatpush1.msra.mxu0 0.0
  %2072 = vmatprep.subr.mxu0 0.0
  %2073 = vmatpush1.msra.mxu0 0.0
  %2074 = vmatprep.subr.mxu0 0.0
  %2075 = vmatpush1.msra.mxu0 0.0
  %2076 = vmatprep.subr.mxu0 0.0
  %2077 = vmatpush1.msra.mxu0 0.0
  %2078 = vmatprep.subr.mxu0 0.0
  %2079 = vmatpush1.msra.mxu0 0.0
  %2080 = vmatprep.subr.mxu0 0.0
  %2081 = vmatpush1.msra.mxu0 0.0
  %2082 = vmatprep.subr.mxu0 0.0
  %2083 = vmatpush1.msra.mxu0 0.0
  %2084 = vmatprep.subr.mxu0 0.0
  %2085 = vmatpush1.msra.mxu0 0.0
  %2086 = vmatprep.subr.mxu0 0.0
  %2087 = vmatpush1.msra.mxu0 0.0
  %2088 = vmatprep.subr.mxu0 0.0
  %2089 = vmatpush1.msra.mxu0 0.0
  %2090 = vmatprep.mubr.f32.mxu0 0.0
  %2091 = vmatmul.mubr.f32.gmra.mrb[0].mxu0 %v2024
  %v2092 = vpop.f32.mrb[0].mxu0
  %v2093 = vadd.f32 %v2022, %v2092
  %v2094 = vpop.f32.mrb[0].mxu0
  %2095 = vdwg.mxu0
  %vm2096 = vcmask 64512
  %2097 = vst.msk [vmem:[%s9] sm:$0xff] %vm2096, %v2093
  // Predicated region
  $region38: #{task_config_network_forward.1} parent=0 // pred_check
    _
  $region39: #{task_config_network_forward.1} parent=0 // pred_check_branch
    %2099 = sbr.rel (0) target = $region41
  $region40: #{task_config_network_forward.1} parent=0 // pred_region
    _
  $region41: #{task_config_network_forward.1} parent=0 // pred_fallthru
    _
  // Predicated region
  $region42: #{task_config_network_forward.1} parent=0 // pred_check
    _
  $region43: #{task_config_network_forward.1} parent=0 // pred_check_branch
    %2101 = sbr.rel (0) target = $region45
  $region44: #{task_config_network_forward.1} parent=0 // pred_region
    _
  $region45: #{task_config_network_forward.1} parent=0 // pred_fallthru
    _

</llo_original>
